<compile_context>
chip_gen: v7x
topology: tpu7x:2x2x1
jax: 0.10.0
libtpu: 0.0.40
codegen_flags: <defaults>
</compile_context>

<pallas_src>
import functools

import jax
import jax.numpy as jnp
from jax.experimental import pallas as pl
from jax.experimental.pallas import tpu as pltpu

POINT_DIM = 3


# ---------------------------------------------------------------------------
# Kernel 1: conv1 -> conv2 -> conv3 fused with global max pool (one batch tile)
# ---------------------------------------------------------------------------
def _stn3d_conv_kernel(x_ref,
                       w1, b1, w2, b2, w3, b3,
                       g_ref,
                       *, bt, n, c3_chunk):
    k = x_ref.shape[1]
    m = bt * n

    # (BT, k, N) native PyTorch layout -> (BT*N, k): a single fused minor-dim
    # transpose + leading-dim reshape (no per-element .T / concat).
    xm = jnp.swapaxes(x_ref[...], 1, 2).reshape(m, k).astype(jnp.bfloat16)

    # conv1 + bn1 + relu   (k -> 64)
    h = jnp.dot(xm, w1[...], preferred_element_type=jnp.float32) + b1[...]
    h = jnp.maximum(h, 0.0).astype(jnp.bfloat16)                      # (M, 64)
    # conv2 + bn2 + relu   (64 -> 128)
    h = jnp.dot(h, w2[...], preferred_element_type=jnp.float32) + b2[...]
    h = jnp.maximum(h, 0.0).astype(jnp.bfloat16)                      # (M, 128)

    # conv3 + bn3 + relu (128 -> 1024) fused with the max pool over points,
    # channel-chunked.  bias/ReLU commute with the per-channel max.
    n_ch = w3.shape[-1]
    parts = []
    for c0 in range(0, n_ch, c3_chunk):
        c1 = min(c0 + c3_chunk, n_ch)
        sc = jnp.dot(h, w3[:, c0:c1],
                     preferred_element_type=jnp.float32)              # (M, CW)
        if n % 8 == 0:
            # One fused sublane reduction per chunk.
            gc = jnp.max(sc.reshape(bt, n, c1 - c0), axis=1)          # (BT, CW)
        else:
            # Fallback when N is not sublane-aligned.
            gc = jnp.concatenate(
                [jnp.max(sc[e * n:(e + 1) * n], axis=0, keepdims=True)
                 for e in range(bt)], axis=0)
        parts.append(jnp.maximum(gc + b3[:, c0:c1], 0.0))
    g = jnp.concatenate(parts, axis=-1)                                # (BT, 1024)
    g_ref[...] = g.astype(g_ref.dtype)


# ---------------------------------------------------------------------------
# Kernel 2: FC head over the whole (padded) batch -> M = B fills the MXU.
# ---------------------------------------------------------------------------
def _stn3d_fc_kernel(g_ref, w4, b4, w5, b5, w6, b6, o_ref):
    g = g_ref[...].astype(jnp.bfloat16)                                # (B, 1024)
    # fc1 + bn4 + relu     (1024 -> 512)
    h = jnp.dot(g, w4[...], preferred_element_type=jnp.float32) + b4[...]
    h = jnp.maximum(h, 0.0).astype(jnp.bfloat16)
    # fc2 + bn5 + relu     (512 -> 256)
    h = jnp.dot(h, w5[...], preferred_element_type=jnp.float32) + b5[...]
    h = jnp.maximum(h, 0.0).astype(jnp.bfloat16)
    # fc3                  (256 -> 128 lane-dense, first 9 cols are real)
    o = jnp.dot(h, w6[...], preferred_element_type=jnp.float32) + b6[...]
    o_ref[...] = o                                                     # (B, 128)


def _full_spec(a):
    nd = a.ndim
    return pl.BlockSpec(a.shape, lambda i, _nd=nd: (0,) * _nd)


def stn3d_forward(x_bkn, params, *, k=POINT_DIM):
    """x_bkn: (B, k, N) float32, native PyTorch layout. Returns (B, k, k)."""
    B, kk, N = x_bkn.shape
    assert kk == k

    # ---- generation-aware tile / VMEM config ------------------------------
    kind = ""
    try:
        kind = jax.devices()[0].device_kind.lower()
    except Exception:
        pass
    big_vmem = ("v5" in kind) or ("v6" in kind)          # 128 MiB VMEM gens
    vmem_limit = (64 << 20) if big_vmem else (32 << 20)  # conservative on v7x
    m_target = 8192 if big_vmem else 4096
    c3_cap = 512 if big_vmem else 256

    # Batch tile: M = BT*N around m_target; BT is a multiple of 8 unless the
    # whole batch fits in one grid step (keeps blocks sublane-aligned).
    bt_cap = max(8, (m_target // max(N, 1)) // 8 * 8)
    if B <= bt_cap:
        BT, Bp = B, B
    else:
        BT = bt_cap
        Bp = ((B + BT - 1) // BT) * BT
    if Bp != B:
        x_bkn = jnp.pad(x_bkn, ((0, Bp - B), (0, 0), (0, 0)))

    # conv3 chunk: keep the (BT*N, chunk) f32 score tile under ~8 MiB.
    cw_budget = (8 << 20) // max(1, BT * N * 4)
    c3_chunk = 128
    for cand in (512, 256):
        if cand <= min(c3_cap, cw_budget):
            c3_chunk = cand
            break

    # ---- parameter prep: bf16 weights, f32 biases, lane-dense fc3 ---------
    (w1, b1, w2, b2, w3, b3, w4, b4, w5, b5, w6, b6) = params
    out_pad = 128
    w6p = jnp.zeros((w6.shape[0], out_pad), w6.dtype).at[:, :w6.shape[1]].set(w6)
    b6p = jnp.zeros((1, out_pad), b6.dtype).at[:, :b6.shape[1]].set(b6)

    def bf16(w):
        return w.astype(jnp.bfloat16)

    conv_params = (bf16(w1), b1, bf16(w2), b2, bf16(w3), b3)
    fc_params = (bf16(w4), b4, bf16(w5), b5, bf16(w6p), b6p)

    # ---- kernel 1: conv stack + fused max pool (grid over batch tiles) ----
    pooled = pl.pallas_call(
        functools.partial(_stn3d_conv_kernel, bt=BT, n=N, c3_chunk=c3_chunk),
        out_shape=jax.ShapeDtypeStruct((Bp, 1024), jnp.bfloat16),
        grid_spec=pltpu.PrefetchScalarGridSpec(
            num_scalar_prefetch=0,
            grid=(Bp // BT,),
            in_specs=[pl.BlockSpec((BT, k, N), lambda bi: (bi, 0, 0))]
                     + [_full_spec(p) for p in conv_params],
            out_specs=pl.BlockSpec((BT, 1024), lambda bi: (bi, 0)),
        ),
        compiler_params=pltpu.CompilerParams(
            dimension_semantics=("parallel",),
            vmem_limit_bytes=vmem_limit,
        ),
    )(x_bkn, *conv_params)

    # ---- kernel 2: FC head over the whole batch in one step (M = B) -------
    out = pl.pallas_call(
        _stn3d_fc_kernel,
        out_shape=jax.ShapeDtypeStruct((Bp, out_pad), jnp.float32),
        grid_spec=pltpu.PrefetchScalarGridSpec(
            num_scalar_prefetch=0,
            grid=(1,),
            in_specs=[_full_spec(pooled)] + [_full_spec(p) for p in fc_params],
            out_specs=pl.BlockSpec((Bp, out_pad), lambda i: (0, 0)),
        ),
        compiler_params=pltpu.CompilerParams(
            dimension_semantics=("arbitrary",),
            vmem_limit_bytes=vmem_limit,
        ),
    )(pooled, *fc_params)

    # Identity add + reshape once in the wrapper (kernel output is lane-dense).
    iden = jnp.eye(k, dtype=jnp.float32).reshape(1, k * k)
    return (out[:B, :k * k] + iden).reshape(B, k, k)


# ---------------------------------------------------------------------------
# Deterministic parameter construction (BN folded, eval mode), kept in f32.
# ---------------------------------------------------------------------------
def make_params(key, k):
    dims = [(k, 64), (64, 128), (128, 1024), (1024, 512), (512, 256),
            (256, k * k)]
    has_bn = [True, True, True, True, True, False]
    eps = 1e-5

    params = []
    keys = jax.random.split(key, len(dims) * 4)
    for i, (cin, cout) in enumerate(dims):
        kw, kb, kg, kbe = keys[4 * i: 4 * i + 4]
        std = 1.0 / jnp.sqrt(jnp.float32(cin))
        W = jax.random.normal(kw, (cin, cout), jnp.float32) * std     # (in, out)
        b = jax.random.normal(kb, (cout,), jnp.float32) * 0.05
        if has_bn[i]:
            gamma = 1.0 + 0.1 * jax.random.normal(kg, (cout,), jnp.float32)
            beta = 0.1 * jax.random.normal(kbe, (cout,), jnp.float32)
            run_mean = jnp.zeros((cout,), jnp.float32)
            run_var = jnp.ones((cout,), jnp.float32)
            scale = gamma / jnp.sqrt(run_var + eps)
            shift = beta - run_mean * scale
            W = W * scale[None, :]
            b = b * scale + shift
        params.append(W)
        params.append(b.reshape(1, cout))
    return tuple(params)


# ---------------------------------------------------------------------------
# Pure-JAX f32 reference (same folded params) for a correctness check.
# ---------------------------------------------------------------------------
def stn3d_reference(x_bkn, params, *, k=POINT_DIM):
    (w1, b1, w2, b2, w3, b3, w4, b4, w5, b5, w6, b6) = params
    x = jnp.transpose(x_bkn, (0, 2, 1))                               # (B, N, k)
    h = jnp.maximum(x @ w1 + b1, 0.0)
    h = jnp.maximum(h @ w2 + b2, 0.0)
    h = jnp.maximum(h @ w3 + b3, 0.0)
    g = jnp.max(h, axis=1)                                            # (B, 1024)
    g = jnp.maximum(g @ w4 + b4, 0.0)
    g = jnp.maximum(g @ w5 + b5, 0.0)
    g = g @ w6 + b6                                                   # (B, k*k)
    return g.reshape(-1, k, k) + jnp.eye(k, dtype=jnp.float32)[None]


if __name__ == "__main__":
    B, N = 2, 128                 # small test shapes; N multiple of 8
    key = jax.random.PRNGKey(0)
    kx, kp = jax.random.split(key)

    x = jax.random.normal(kx, (B, POINT_DIM, N), jnp.float32)         # (B, 3, N)
    params = make_params(kp, POINT_DIM)

    out = jax.block_until_ready(stn3d_forward(x, params))
    ref = stn3d_reference(x, params)

    assert out.shape == (B, POINT_DIM, POINT_DIM), out.shape
    max_err = float(jnp.max(jnp.abs(out - ref)))
    # Kernel uses bf16 matmul inputs (f32 accumulation); reference is pure f32.
    assert jnp.allclose(out, ref, rtol=5e-2, atol=5e-2), max_err

    print("KERNEL_OK")
</pallas_src>

<mosaic_0001>
module attributes {stable_mosaic.version = 11 : i64} {
  func.func @_stn3d_conv_kernel(%arg0: i32, %arg1: memref<2x3x128xf32, #tpu.memory_space<vmem>>, %arg2: memref<3x64xbf16, #tpu.memory_space<vmem>>, %arg3: memref<1x64xf32, #tpu.memory_space<vmem>>, %arg4: memref<64x128xbf16, #tpu.memory_space<vmem>>, %arg5: memref<1x128xf32, #tpu.memory_space<vmem>>, %arg6: memref<128x1024xbf16, #tpu.memory_space<vmem>>, %arg7: memref<1x1024xf32, #tpu.memory_space<vmem>>, %arg8: memref<2x1024xbf16, #tpu.memory_space<vmem>>) attributes {dimension_semantics = [#tpu.dimension_semantics<parallel>], iteration_bounds = array<i64: 1>, scalar_prefetch = 0 : i64, scratch_operands = 0 : i64, tpu.core_type = #tpu.core_type<tc>, window_params = [{transform_indices = @transform_0, window_bounds = array<i64: 2, 3, 128>}, {pipeline_mode = #tpu.pipeline_mode<synchronous>, transform_indices = @transform_1, window_bounds = array<i64: 3, 64>}, {pipeline_mode = #tpu.pipeline_mode<synchronous>, transform_indices = @transform_2, window_bounds = array<i64: 1, 64>}, {pipeline_mode = #tpu.pipeline_mode<synchronous>, transform_indices = @transform_3, window_bounds = array<i64: 64, 128>}, {pipeline_mode = #tpu.pipeline_mode<synchronous>, transform_indices = @transform_4, window_bounds = array<i64: 1, 128>}, {pipeline_mode = #tpu.pipeline_mode<synchronous>, transform_indices = @transform_5, window_bounds = array<i64: 128, 1024>}, {pipeline_mode = #tpu.pipeline_mode<synchronous>, transform_indices = @transform_6, window_bounds = array<i64: 1, 1024>}, {transform_indices = @transform_7, window_bounds = array<i64: 2, 1024>}]} {
    %c0 = arith.constant 0 : index
    %c0_0 = arith.constant 0 : index
    %c0_1 = arith.constant 0 : index
    %0 = vector.load %arg1[%c0, %c0_0, %c0_1] : memref<2x3x128xf32, #tpu.memory_space<vmem>>, vector<2x3x128xf32>
    %1 = tpu.transpose %0, [0, 2, 1] : vector<2x3x128xf32> -> vector<2x128x3xf32>
    %2 = vector.shape_cast %1 : vector<2x128x3xf32> to vector<256x3xf32>
    %3 = arith.truncf %2 : vector<256x3xf32> to vector<256x3xbf16>
    %c0_2 = arith.constant 0 : index
    %c0_3 = arith.constant 0 : index
    %4 = vector.load %arg2[%c0_2, %c0_3] : memref<3x64xbf16, #tpu.memory_space<vmem>>, vector<3x64xbf16>
    %cst = arith.constant dense<0.000000e+00> : vector<256x64xf32>
    %5 = tpu.matmul %3, %4, %cst {dimension_numbers = #tpu.dot_dimension_numbers<[1], [0], [0], [1], [0, 0, 1, 1], [], []>} : vector<256x3xbf16>, vector<3x64xbf16>, vector<256x64xf32> -> vector<256x64xf32>
    %c0_4 = arith.constant 0 : index
    %c0_5 = arith.constant 0 : index
    %6 = vector.load %arg3[%c0_4, %c0_5] : memref<1x64xf32, #tpu.memory_space<vmem>>, vector<1x64xf32>
    %7 = vector.broadcast %6 : vector<1x64xf32> to vector<256x64xf32>
    %8 = arith.addf %5, %7 : vector<256x64xf32>
    %cst_6 = arith.constant 0.000000e+00 : f32
    %9 = vector.broadcast %cst_6 : f32 to vector<256x64xf32>
    %10 = arith.maximumf %8, %9 : vector<256x64xf32>
    %11 = arith.truncf %10 : vector<256x64xf32> to vector<256x64xbf16>
    %c0_7 = arith.constant 0 : index
    %c0_8 = arith.constant 0 : index
    %12 = vector.load %arg4[%c0_7, %c0_8] : memref<64x128xbf16, #tpu.memory_space<vmem>>, vector<64x128xbf16>
    %cst_9 = arith.constant dense<0.000000e+00> : vector<256x128xf32>
    %13 = tpu.matmul %11, %12, %cst_9 {dimension_numbers = #tpu.dot_dimension_numbers<[1], [0], [0], [1], [0, 0, 1, 1], [], []>} : vector<256x64xbf16>, vector<64x128xbf16>, vector<256x128xf32> -> vector<256x128xf32>
    %c0_10 = arith.constant 0 : index
    %c0_11 = arith.constant 0 : index
    %14 = vector.load %arg5[%c0_10, %c0_11] : memref<1x128xf32, #tpu.memory_space<vmem>>, vector<1x128xf32>
    %15 = vector.broadcast %14 : vector<1x128xf32> to vector<256x128xf32>
    %16 = arith.addf %13, %15 : vector<256x128xf32>
    %cst_12 = arith.constant 0.000000e+00 : f32
    %17 = vector.broadcast %cst_12 : f32 to vector<256x128xf32>
    %18 = arith.maximumf %16, %17 : vector<256x128xf32>
    %19 = arith.truncf %18 : vector<256x128xf32> to vector<256x128xbf16>
    %c0_13 = arith.constant 0 : index
    %c0_14 = arith.constant 0 : index
    %20 = vector.load %arg6[%c0_13, %c0_14] : memref<128x1024xbf16, #tpu.memory_space<vmem>>, vector<128x256xbf16>
    %cst_15 = arith.constant dense<0.000000e+00> : vector<256x256xf32>
    %21 = tpu.matmul %19, %20, %cst_15 {dimension_numbers = #tpu.dot_dimension_numbers<[1], [0], [0], [1], [0, 0, 1, 1], [], []>} : vector<256x128xbf16>, vector<128x256xbf16>, vector<256x256xf32> -> vector<256x256xf32>
    %22 = vector.shape_cast %21 : vector<256x256xf32> to vector<2x128x256xf32>
    %cst_16 = arith.constant dense<0xFF800000> : vector<2x256xf32>
    %23 = vector.multi_reduction <maximumf>, %22, %cst_16 [1] : vector<2x128x256xf32> to vector<2x256xf32>
    %c0_17 = arith.constant 0 : index
    %c0_18 = arith.constant 0 : index
    %24 = vector.load %arg7[%c0_17, %c0_18] : memref<1x1024xf32, #tpu.memory_space<vmem>>, vector<1x256xf32>
    %25 = vector.broadcast %24 : vector<1x256xf32> to vector<2x256xf32>
    %26 = arith.addf %23, %25 : vector<2x256xf32>
    %cst_19 = arith.constant 0.000000e+00 : f32
    %27 = vector.broadcast %cst_19 : f32 to vector<2x256xf32>
    %28 = arith.maximumf %26, %27 : vector<2x256xf32>
    %c0_20 = arith.constant 0 : index
    %c256 = arith.constant 256 : index
    %29 = vector.load %arg6[%c0_20, %c256] : memref<128x1024xbf16, #tpu.memory_space<vmem>>, vector<128x256xbf16>
    %cst_21 = arith.constant dense<0.000000e+00> : vector<256x256xf32>
    %30 = tpu.matmul %19, %29, %cst_21 {dimension_numbers = #tpu.dot_dimension_numbers<[1], [0], [0], [1], [0, 0, 1, 1], [], []>} : vector<256x128xbf16>, vector<128x256xbf16>, vector<256x256xf32> -> vector<256x256xf32>
    %31 = vector.shape_cast %30 : vector<256x256xf32> to vector<2x128x256xf32>
    %cst_22 = arith.constant dense<0xFF800000> : vector<2x256xf32>
    %32 = vector.multi_reduction <maximumf>, %31, %cst_22 [1] : vector<2x128x256xf32> to vector<2x256xf32>
    %c0_23 = arith.constant 0 : index
    %c256_24 = arith.constant 256 : index
    %33 = vector.load %arg7[%c0_23, %c256_24] : memref<1x1024xf32, #tpu.memory_space<vmem>>, vector<1x256xf32>
    %34 = vector.broadcast %33 : vector<1x256xf32> to vector<2x256xf32>
    %35 = arith.addf %32, %34 : vector<2x256xf32>
    %cst_25 = arith.constant 0.000000e+00 : f32
    %36 = vector.broadcast %cst_25 : f32 to vector<2x256xf32>
    %37 = arith.maximumf %35, %36 : vector<2x256xf32>
    %c0_26 = arith.constant 0 : index
    %c512 = arith.constant 512 : index
    %38 = vector.load %arg6[%c0_26, %c512] : memref<128x1024xbf16, #tpu.memory_space<vmem>>, vector<128x256xbf16>
    %cst_27 = arith.constant dense<0.000000e+00> : vector<256x256xf32>
    %39 = tpu.matmul %19, %38, %cst_27 {dimension_numbers = #tpu.dot_dimension_numbers<[1], [0], [0], [1], [0, 0, 1, 1], [], []>} : vector<256x128xbf16>, vector<128x256xbf16>, vector<256x256xf32> -> vector<256x256xf32>
    %40 = vector.shape_cast %39 : vector<256x256xf32> to vector<2x128x256xf32>
    %cst_28 = arith.constant dense<0xFF800000> : vector<2x256xf32>
    %41 = vector.multi_reduction <maximumf>, %40, %cst_28 [1] : vector<2x128x256xf32> to vector<2x256xf32>
    %c0_29 = arith.constant 0 : index
    %c512_30 = arith.constant 512 : index
    %42 = vector.load %arg7[%c0_29, %c512_30] : memref<1x1024xf32, #tpu.memory_space<vmem>>, vector<1x256xf32>
    %43 = vector.broadcast %42 : vector<1x256xf32> to vector<2x256xf32>
    %44 = arith.addf %41, %43 : vector<2x256xf32>
    %cst_31 = arith.constant 0.000000e+00 : f32
    %45 = vector.broadcast %cst_31 : f32 to vector<2x256xf32>
    %46 = arith.maximumf %44, %45 : vector<2x256xf32>
    %c0_32 = arith.constant 0 : index
    %c768 = arith.constant 768 : index
    %47 = vector.load %arg6[%c0_32, %c768] : memref<128x1024xbf16, #tpu.memory_space<vmem>>, vector<128x256xbf16>
    %cst_33 = arith.constant dense<0.000000e+00> : vector<256x256xf32>
    %48 = tpu.matmul %19, %47, %cst_33 {dimension_numbers = #tpu.dot_dimension_numbers<[1], [0], [0], [1], [0, 0, 1, 1], [], []>} : vector<256x128xbf16>, vector<128x256xbf16>, vector<256x256xf32> -> vector<256x256xf32>
    %49 = vector.shape_cast %48 : vector<256x256xf32> to vector<2x128x256xf32>
    %cst_34 = arith.constant dense<0xFF800000> : vector<2x256xf32>
    %50 = vector.multi_reduction <maximumf>, %49, %cst_34 [1] : vector<2x128x256xf32> to vector<2x256xf32>
    %c0_35 = arith.constant 0 : index
    %c768_36 = arith.constant 768 : index
    %51 = vector.load %arg7[%c0_35, %c768_36] : memref<1x1024xf32, #tpu.memory_space<vmem>>, vector<1x256xf32>
    %52 = vector.broadcast %51 : vector<1x256xf32> to vector<2x256xf32>
    %53 = arith.addf %50, %52 : vector<2x256xf32>
    %cst_37 = arith.constant 0.000000e+00 : f32
    %54 = vector.broadcast %cst_37 : f32 to vector<2x256xf32>
    %55 = arith.maximumf %53, %54 : vector<2x256xf32>
    %56 = tpu.concatenate %28, %37, %46, %55 in 1 : vector<2x256xf32>, vector<2x256xf32>, vector<2x256xf32>, vector<2x256xf32> -> vector<2x1024xf32>
    %57 = arith.truncf %56 : vector<2x1024xf32> to vector<2x1024xbf16>
    %c0_38 = arith.constant 0 : index
    %c0_39 = arith.constant 0 : index
    %58 = vector.load %arg8[%c0_38, %c0_39] : memref<2x1024xbf16, #tpu.memory_space<vmem>>, vector<2x1024xbf16>
    tpu.vector_store %arg8[%c0_38, %c0_39], %57 {strides = array<i32>} : memref<2x1024xbf16, #tpu.memory_space<vmem>>, vector<2x1024xbf16>,
    return
  }
  func.func @transform_0(%arg0: i32) -> (i32, i32, i32) {
    %c0_i32 = arith.constant 0 : i32
    %c0_i32_0 = arith.constant 0 : i32
    %c0_i32_1 = arith.constant 0 : i32
    return %arg0, %c0_i32, %c0_i32_0 : i32, i32, i32
  }
  func.func @transform_1(%arg0: i32) -> (i32, i32) {
    %c0_i32 = arith.constant 0 : i32
    %c0_i32_0 = arith.constant 0 : i32
    %c0_i32_1 = arith.constant 0 : i32
    return %c0_i32, %c0_i32_0 : i32, i32
  }
  func.func @transform_2(%arg0: i32) -> (i32, i32) {
    %c0_i32 = arith.constant 0 : i32
    %c0_i32_0 = arith.constant 0 : i32
    %c0_i32_1 = arith.constant 0 : i32
    return %c0_i32, %c0_i32_0 : i32, i32
  }
  func.func @transform_3(%arg0: i32) -> (i32, i32) {
    %c0_i32 = arith.constant 0 : i32
    %c0_i32_0 = arith.constant 0 : i32
    %c0_i32_1 = arith.constant 0 : i32
    return %c0_i32, %c0_i32_0 : i32, i32
  }
  func.func @transform_4(%arg0: i32) -> (i32, i32) {
    %c0_i32 = arith.constant 0 : i32
    %c0_i32_0 = arith.constant 0 : i32
    %c0_i32_1 = arith.constant 0 : i32
    return %c0_i32, %c0_i32_0 : i32, i32
  }
  func.func @transform_5(%arg0: i32) -> (i32, i32) {
    %c0_i32 = arith.constant 0 : i32
    %c0_i32_0 = arith.constant 0 : i32
    %c0_i32_1 = arith.constant 0 : i32
    return %c0_i32, %c0_i32_0 : i32, i32
  }
  func.func @transform_6(%arg0: i32) -> (i32, i32) {
    %c0_i32 = arith.constant 0 : i32
    %c0_i32_0 = arith.constant 0 : i32
    %c0_i32_1 = arith.constant 0 : i32
    return %c0_i32, %c0_i32_0 : i32, i32
  }
  func.func @transform_7(%arg0: i32) -> (i32, i32) {
    %c0_i32 = arith.constant 0 : i32
    %c0_i32_0 = arith.constant 0 : i32
    return %arg0, %c0_i32 : i32, i32
  }
}

</mosaic_0001>

<llo_original>
// kernel: tpu_custom_call.1
$region0: #{tpu_custom_call.1}
  #allocation0 [shape = 'u32[]', space=smem, size = 0x4, offset = 0x4, fixed_abs, tag = 'smem constant byte address 0x4 - core index']
  #allocation1 [shape = 'u32[144,128]{1,0:T(1,128)}', space=vmem, size = 0x12000, scoped, tag = 'internal scratch']
  %s0 = inlined_call_operand.vmem [shape: f32[2,3,128], index: 0, kind: input, shape index: {}]
  %s1 = inlined_call_operand.vmem [shape: bf16[3,64], index: 1, kind: input, shape index: {}]
  %s2 = inlined_call_operand.vmem [shape: f32[1,64], index: 2, kind: input, shape index: {}]
  %s3 = inlined_call_operand.hbm [shape: bf16[64,128], index: 3, kind: input, shape index: {}]
  %s4 = inlined_call_operand.vmem [shape: f32[1,128], index: 4, kind: input, shape index: {}]
  %s5 = inlined_call_operand.hbm [shape: bf16[128,1024], index: 5, kind: input, shape index: {}]
  %s6 = inlined_call_operand.vmem [shape: f32[1,1024], index: 6, kind: input, shape index: {}]
  %s7 = inlined_call_operand.hbm [shape: bf16[2,1024], index: 7, kind: output, shape index: {}]
  %s8 = sld [smem:[#allocation0]]
  $region46: #{tpu_custom_call.1} parent=0
    _
  %s10 = ssub.s32 1, %s8
  %s11 = scalar_select 0, %s10, %s8
  $region1: #{tpu_custom_call.1} parent=0
    #allocation2 [shape = 'u8[16384]{0}', space=vmem, size = 0x4000, scoped, tag = 'input window, operand 3, single buffered']
    #allocation3 [shape = 's32[1]{0}', space=sflag, size = 0x4, scoped, tag = 'scoped memory for tpu_custom_call.1']
    #allocation4 [shape = 's32[1]{0}', space=sflag, size = 0x4, scoped, tag = 'scoped memory for tpu_custom_call.1']
    #allocation5 [shape = 'u8[262144]{0}', space=vmem, size = 0x40000, scoped, tag = 'input window, operand 5, single buffered']
    #allocation6 [shape = 's32[1]{0}', space=sflag, size = 0x4, scoped, tag = 'scoped memory for tpu_custom_call.1']
    #allocation7 [shape = 'u8[4096]{0}', space=vmem, size = 0x1000, scoped, tag = 'output window, operand 0, single buffered']
    %12 = vsyncpa [#allocation3], 0
    %13 = vsyncpa [#allocation6], 0
    %14 = vsyncpa [#allocation4], 0
    // Predicated region
    $region2: #{tpu_custom_call.1} parent=1 // pred_check
      _
    $region3: #{tpu_custom_call.1} parent=1 // pred_check_branch
      %16 = sbr.rel (0) target = $region5
    $region4: #{tpu_custom_call.1} parent=1 // pred_region
      _
    $region5: #{tpu_custom_call.1} parent=1 // pred_fallthru
      _
    // Predicated region
    $region6: #{tpu_custom_call.1} parent=1 // pred_check
      _
    $region7: #{tpu_custom_call.1} parent=1 // pred_check_branch
      %18 = sbr.rel (0) target = $region9
    $region8: #{tpu_custom_call.1} parent=1 // pred_region
      _
    $region9: #{tpu_custom_call.1} parent=1 // pred_fallthru
      _
    // Predicated region
    $region10: #{tpu_custom_call.1} parent=1 // pred_check
      _
    $region11: #{tpu_custom_call.1} parent=1 // pred_check_branch
      %20 = sbr.rel (0) target = $region13
    $region12: #{tpu_custom_call.1} parent=1 // pred_region
      _
    $region13: #{tpu_custom_call.1} parent=1 // pred_fallthru
      _
    // Predicated region
    $region14: #{tpu_custom_call.1} parent=1 // pred_check
      _
    $region15: #{tpu_custom_call.1} parent=1 // pred_check_branch
      %22 = sbr.rel (0) target = $region17
    $region16: #{tpu_custom_call.1} parent=1 // pred_region
      %s24 = ssub.s32 512, 512
      %25 = vsyncadd [#allocation3], %s24
      %s26 = sshll.u32 [#allocation2], 4
      %s27 = int_to_ptr.vmem [resolvable:$true] %s26
      %32 = dma.hbm_to_vmem [thread:$0]  %s3, 512, %s27, [#allocation3], 64, 64, 4
    $region17: #{tpu_custom_call.1} parent=1 // pred_fallthru
      _
    // Predicated region
    $region18: #{tpu_custom_call.1} parent=1 // pred_check
      _
    $region19: #{tpu_custom_call.1} parent=1 // pred_check_branch
      %34 = sbr.rel (0) target = $region21
    $region20: #{tpu_custom_call.1} parent=1 // pred_region
      _
    $region21: #{tpu_custom_call.1} parent=1 // pred_fallthru
      _
    // Predicated region
    $region22: #{tpu_custom_call.1} parent=1 // pred_check
      _
    $region23: #{tpu_custom_call.1} parent=1 // pred_check_branch
      %36 = sbr.rel (0) target = $region25
    $region24: #{tpu_custom_call.1} parent=1 // pred_region
      %s38 = ssub.s32 8192, 8192
      %39 = vsyncadd [#allocation6], %s38
      %s40 = sshll.u32 [#allocation5], 4
      %s41 = int_to_ptr.vmem [resolvable:$true] %s40
      %46 = dma.hbm_to_vmem [thread:$0]  %s5, 8192, %s41, [#allocation6], 512, 512, 32
    $region25: #{tpu_custom_call.1} parent=1 // pred_fallthru
      _
    // Predicated region
    $region26: #{tpu_custom_call.1} parent=1 // pred_check
      _
    $region27: #{tpu_custom_call.1} parent=1 // pred_check_branch
      %48 = sbr.rel (0) target = $region29
    $region28: #{tpu_custom_call.1} parent=1 // pred_region
      _
    $region29: #{tpu_custom_call.1} parent=1 // pred_fallthru
      _
    // Predicated region
    $region30: #{tpu_custom_call.1} parent=1 // pred_check
      _
    $region31: #{tpu_custom_call.1} parent=1 // pred_check_branch
      %50 = sbr.rel (0) target = $region33
    $region32: #{tpu_custom_call.1} parent=1 // pred_region
      %51 = dma.done [#allocation3], 512
    $region33: #{tpu_custom_call.1} parent=1 // pred_fallthru
      _
    // Predicated region
    $region34: #{tpu_custom_call.1} parent=1 // pred_check
      _
    $region35: #{tpu_custom_call.1} parent=1 // pred_check_branch
      %53 = sbr.rel (0) target = $region37
    $region36: #{tpu_custom_call.1} parent=1 // pred_region
      %54 = dma.done [#allocation6], 8192
    $region37: #{tpu_custom_call.1} parent=1 // pred_fallthru
      _
    %v56 = vld [vmem:[%s0] sm:$0x7]
    %v57 = vld [vmem:[%s0 + $0x4] sm:$0x7]
    %58 = vxpose.xlu0.b32.start [1/16] %v56, 128
    %59 = vxpose.xlu0.b32.cont [2/16] 0.0, 128
    %60 = vxpose.xlu0.b32.cont [3/16] 0.0, 128
    %61 = vxpose.xlu0.b32.cont [4/16] 0.0, 128
    %62 = vxpose.xlu0.b32.cont [5/16] 0.0, 128
    %63 = vxpose.xlu0.b32.cont [6/16] 0.0, 128
    %64 = vxpose.xlu0.b32.cont [7/16] 0.0, 128
    %65 = vxpose.xlu0.b32.cont [8/16] 0.0, 128
    %66 = vxpose.xlu0.b32.cont [9/16] 0.0, 128
    %67 = vxpose.xlu0.b32.cont [10/16] 0.0, 128
    %68 = vxpose.xlu0.b32.cont [11/16] 0.0, 128
    %69 = vxpose.xlu0.b32.cont [12/16] 0.0, 128
    %70 = vxpose.xlu0.b32.cont [13/16] 0.0, 128
    %71 = vxpose.xlu0.b32.cont [14/16] 0.0, 128
    %72 = vxpose.xlu0.b32.cont [15/16] 0.0, 128
    %73 = vxpose.xlu0.b32.end [16/16] 0.0, 128
    %v74 = vpop.trf.xlu0
    %v75 = vpop.trf.xlu0
    %v76 = vpop.trf.xlu0
    %v77 = vpop.trf.xlu0
    %v78 = vpop.trf.xlu0
    %v79 = vpop.trf.xlu0
    %v80 = vpop.trf.xlu0
    %v81 = vpop.trf.xlu0
    %v82 = vpop.trf.xlu0
    %v83 = vpop.trf.xlu0
    %v84 = vpop.trf.xlu0
    %v85 = vpop.trf.xlu0
    %v86 = vpop.trf.xlu0
    %v87 = vpop.trf.xlu0
    %v88 = vpop.trf.xlu0
    %v89 = vpop.trf.xlu0
    %90 = vxpose.xlu0.b32.start [1/16] %v57, 128
    %91 = vxpose.xlu0.b32.cont [2/16] 0.0, 128
    %92 = vxpose.xlu0.b32.cont [3/16] 0.0, 128
    %93 = vxpose.xlu0.b32.cont [4/16] 0.0, 128
    %94 = vxpose.xlu0.b32.cont [5/16] 0.0, 128
    %95 = vxpose.xlu0.b32.cont [6/16] 0.0, 128
    %96 = vxpose.xlu0.b32.cont [7/16] 0.0, 128
    %97 = vxpose.xlu0.b32.cont [8/16] 0.0, 128
    %98 = vxpose.xlu0.b32.cont [9/16] 0.0, 128
    %99 = vxpose.xlu0.b32.cont [10/16] 0.0, 128
    %100 = vxpose.xlu0.b32.cont [11/16] 0.0, 128
    %101 = vxpose.xlu0.b32.cont [12/16] 0.0, 128
    %102 = vxpose.xlu0.b32.cont [13/16] 0.0, 128
    %103 = vxpose.xlu0.b32.cont [14/16] 0.0, 128
    %104 = vxpose.xlu0.b32.cont [15/16] 0.0, 128
    %105 = vxpose.xlu0.b32.end [16/16] 0.0, 128
    %v106 = vpop.trf.xlu0
    %v107 = vpop.trf.xlu0
    %v108 = vpop.trf.xlu0
    %v109 = vpop.trf.xlu0
    %v110 = vpop.trf.xlu0
    %v111 = vpop.trf.xlu0
    %v112 = vpop.trf.xlu0
    %v113 = vpop.trf.xlu0
    %v114 = vpop.trf.xlu0
    %v115 = vpop.trf.xlu0
    %v116 = vpop.trf.xlu0
    %v117 = vpop.trf.xlu0
    %v118 = vpop.trf.xlu0
    %v119 = vpop.trf.xlu0
    %v120 = vpop.trf.xlu0
    %v121 = vpop.trf.xlu0
    %v122 = vpack.c.bf16 %v75, %v74
    %v123 = vpack.c.bf16 %v77, %v76
    %v124 = vpack.c.bf16 %v79, %v78
    %v125 = vpack.c.bf16 %v81, %v80
    %v126 = vpack.c.bf16 %v83, %v82
    %v127 = vpack.c.bf16 %v85, %v84
    %v128 = vpack.c.bf16 %v87, %v86
    %v129 = vpack.c.bf16 %v89, %v88
    %v130 = vpack.c.bf16 %v107, %v106
    %v131 = vpack.c.bf16 %v109, %v108
    %v132 = vpack.c.bf16 %v111, %v110
    %v133 = vpack.c.bf16 %v113, %v112
    %v134 = vpack.c.bf16 %v115, %v114
    %v135 = vpack.c.bf16 %v117, %v116
    %v136 = vpack.c.bf16 %v119, %v118
    %v137 = vpack.c.bf16 %v121, %v120
    %v138 = vld [vmem:[%s1] sm:$0x3]
    %v139 = vld [vmem:[%s2] sm:$0x1]
    %v141 = vlaneseq
    %v142 = vshrl.u32 %v141, 7
    %v143 = vsub.s32 0, %v142
    %v144 = vrot.slane %v139, %v143
    %vm146 = vcmask 23552
    %v148 = vsel %vm146, %v122, 0
    %v151 = vsel %vm146, %v123, 0
    %v154 = vsel %vm146, %v124, 0
    %v157 = vsel %vm146, %v125, 0
    %v160 = vsel %vm146, %v126, 0
    %v163 = vsel %vm146, %v127, 0
    %v166 = vsel %vm146, %v128, 0
    %v169 = vsel %vm146, %v129, 0
    %v172 = vsel %vm146, %v130, 0
    %v175 = vsel %vm146, %v131, 0
    %v178 = vsel %vm146, %v132, 0
    %v181 = vsel %vm146, %v133, 0
    %v184 = vsel %vm146, %v134, 0
    %v187 = vsel %vm146, %v135, 0
    %v190 = vsel %vm146, %v136, 0
    %v193 = vsel %vm146, %v137, 0
    %vm195 = vcmask 1040384
    %vm196 = vcmask 1041408
    %v197 = vsel %vm195, 4294967295, 65535
    %v198 = vsel %vm196, %v197, 0
    %v200 = vand.u32 %v138, %v198
    %202 = vmatprep.subr.bf16.mxu0 0
    %203 = vmatpush1.bf16.msra.mxu0 %v200
    %204 = vmatprep.subr.bf16.mxu0 0
    %205 = vmatpush1.bf16.msra.mxu0 0
    %206 = vmatprep.subr.bf16.mxu0 0
    %207 = vmatpush1.bf16.msra.mxu0 0
    %208 = vmatprep.subr.bf16.mxu0 0
    %209 = vmatpush1.bf16.msra.mxu0 0
    %210 = vmatprep.subr.bf16.mxu0 0
    %211 = vmatpush1.bf16.msra.mxu0 0
    %212 = vmatprep.subr.bf16.mxu0 0
    %213 = vmatpush1.bf16.msra.mxu0 0
    %214 = vmatprep.subr.bf16.mxu0 0
    %215 = vmatpush1.bf16.msra.mxu0 0
    %216 = vmatprep.subr.bf16.mxu0 0
    %217 = vmatpush1.bf16.msra.mxu0 0
    %218 = vmatprep.subr.bf16.mxu0 0
    %219 = vmatpush1.bf16.msra.mxu0 0
    %220 = vmatprep.subr.bf16.mxu0 0
    %221 = vmatpush1.bf16.msra.mxu0 0
    %222 = vmatprep.subr.bf16.mxu0 0
    %223 = vmatpush1.bf16.msra.mxu0 0
    %224 = vmatprep.subr.bf16.mxu0 0
    %225 = vmatpush1.bf16.msra.mxu0 0
    %226 = vmatprep.subr.bf16.mxu0 0
    %227 = vmatpush1.bf16.msra.mxu0 0
    %228 = vmatprep.subr.bf16.mxu0 0
    %229 = vmatpush1.bf16.msra.mxu0 0
    %230 = vmatprep.subr.bf16.mxu0 0
    %231 = vmatpush1.bf16.msra.mxu0 0
    %232 = vmatprep.subr.bf16.mxu0 0
    %233 = vmatpush1.bf16.msra.mxu0 0
    %234 = vmatprep.mubr.bf16.mxu0 0
    %235 = vmatmul.mubr.bf16.gmra.mrb[0].mxu0 %v148
    %v236 = vpop.f32.mrb[0].mxu0
    %v237 = vadd.f32 %v144, %v236
    %v238 = vpop.f32.mrb[0].mxu0
    %v239 = vpop.f32.mrb[0].mxu0
    %v240 = vadd.f32 %v144, %v239
    %v241 = vpop.f32.mrb[0].mxu0
    %242 = vmatprep.mubr.bf16.mxu0 0
    %243 = vmatmul.mubr.bf16.gmra.mrb[0].mxu0 %v151
    %v244 = vpop.f32.mrb[0].mxu0
    %v245 = vadd.f32 %v144, %v244
    %v246 = vpop.f32.mrb[0].mxu0
    %v247 = vpop.f32.mrb[0].mxu0
    %v248 = vadd.f32 %v144, %v247
    %v249 = vpop.f32.mrb[0].mxu0
    %250 = vmatprep.mubr.bf16.mxu0 0
    %251 = vmatmul.mubr.bf16.gmra.mrb[0].mxu0 %v154
    %v252 = vpop.f32.mrb[0].mxu0
    %v253 = vadd.f32 %v144, %v252
    %v254 = vpop.f32.mrb[0].mxu0
    %v255 = vpop.f32.mrb[0].mxu0
    %v256 = vadd.f32 %v144, %v255
    %v257 = vpop.f32.mrb[0].mxu0
    %258 = vmatprep.mubr.bf16.mxu0 0
    %259 = vmatmul.mubr.bf16.gmra.mrb[0].mxu0 %v157
    %v260 = vpop.f32.mrb[0].mxu0
    %v261 = vadd.f32 %v144, %v260
    %v262 = vpop.f32.mrb[0].mxu0
    %v263 = vpop.f32.mrb[0].mxu0
    %v264 = vadd.f32 %v144, %v263
    %v265 = vpop.f32.mrb[0].mxu0
    %266 = vmatprep.mubr.bf16.mxu0 0
    %267 = vmatmul.mubr.bf16.gmra.mrb[0].mxu0 %v160
    %v268 = vpop.f32.mrb[0].mxu0
    %v269 = vadd.f32 %v144, %v268
    %v270 = vpop.f32.mrb[0].mxu0
    %v271 = vpop.f32.mrb[0].mxu0
    %v272 = vadd.f32 %v144, %v271
    %v273 = vpop.f32.mrb[0].mxu0
    %274 = vmatprep.mubr.bf16.mxu0 0
    %275 = vmatmul.mubr.bf16.gmra.mrb[0].mxu0 %v163
    %v276 = vpop.f32.mrb[0].mxu0
    %v277 = vadd.f32 %v144, %v276
    %v278 = vpop.f32.mrb[0].mxu0
    %v279 = vpop.f32.mrb[0].mxu0
    %v280 = vadd.f32 %v144, %v279
    %v281 = vpop.f32.mrb[0].mxu0
    %282 = vmatprep.mubr.bf16.mxu0 0
    %283 = vmatmul.mubr.bf16.gmra.mrb[0].mxu0 %v166
    %v284 = vpop.f32.mrb[0].mxu0
    %v285 = vadd.f32 %v144, %v284
    %v286 = vpop.f32.mrb[0].mxu0
    %v287 = vpop.f32.mrb[0].mxu0
    %v288 = vadd.f32 %v144, %v287
    %v289 = vpop.f32.mrb[0].mxu0
    %290 = vmatprep.mubr.bf16.mxu0 0
    %291 = vmatmul.mubr.bf16.gmra.mrb[0].mxu0 %v169
    %v292 = vpop.f32.mrb[0].mxu0
    %v293 = vadd.f32 %v144, %v292
    %v294 = vpop.f32.mrb[0].mxu0
    %v295 = vpop.f32.mrb[0].mxu0
    %v296 = vadd.f32 %v144, %v295
    %v297 = vpop.f32.mrb[0].mxu0
    %298 = vmatprep.mubr.bf16.mxu0 0
    %299 = vmatmul.mubr.bf16.gmra.mrb[0].mxu0 %v172
    %v300 = vpop.f32.mrb[0].mxu0
    %v301 = vadd.f32 %v144, %v300
    %v302 = vpop.f32.mrb[0].mxu0
    %v303 = vpop.f32.mrb[0].mxu0
    %v304 = vadd.f32 %v144, %v303
    %v305 = vpop.f32.mrb[0].mxu0
    %306 = vmatprep.mubr.bf16.mxu0 0
    %307 = vmatmul.mubr.bf16.gmra.mrb[0].mxu0 %v175
    %v308 = vpop.f32.mrb[0].mxu0
    %v309 = vadd.f32 %v144, %v308
    %v310 = vpop.f32.mrb[0].mxu0
    %v311 = vpop.f32.mrb[0].mxu0
    %v312 = vadd.f32 %v144, %v311
    %v313 = vpop.f32.mrb[0].mxu0
    %314 = vmatprep.mubr.bf16.mxu0 0
    %315 = vmatmul.mubr.bf16.gmra.mrb[0].mxu0 %v178
    %v316 = vpop.f32.mrb[0].mxu0
    %v317 = vadd.f32 %v144, %v316
    %v318 = vpop.f32.mrb[0].mxu0
    %v319 = vpop.f32.mrb[0].mxu0
    %v320 = vadd.f32 %v144, %v319
    %v321 = vpop.f32.mrb[0].mxu0
    %322 = vmatprep.mubr.bf16.mxu0 0
    %323 = vmatmul.mubr.bf16.gmra.mrb[0].mxu0 %v181
    %v324 = vpop.f32.mrb[0].mxu0
    %v325 = vadd.f32 %v144, %v324
    %v326 = vpop.f32.mrb[0].mxu0
    %v327 = vpop.f32.mrb[0].mxu0
    %v328 = vadd.f32 %v144, %v327
    %v329 = vpop.f32.mrb[0].mxu0
    %330 = vmatprep.mubr.bf16.mxu0 0
    %331 = vmatmul.mubr.bf16.gmra.mrb[0].mxu0 %v184
    %v332 = vpop.f32.mrb[0].mxu0
    %v333 = vadd.f32 %v144, %v332
    %v334 = vpop.f32.mrb[0].mxu0
    %v335 = vpop.f32.mrb[0].mxu0
    %v336 = vadd.f32 %v144, %v335
    %v337 = vpop.f32.mrb[0].mxu0
    %338 = vmatprep.mubr.bf16.mxu0 0
    %339 = vmatmul.mubr.bf16.gmra.mrb[0].mxu0 %v187
    %v340 = vpop.f32.mrb[0].mxu0
    %v341 = vadd.f32 %v144, %v340
    %v342 = vpop.f32.mrb[0].mxu0
    %v343 = vpop.f32.mrb[0].mxu0
    %v344 = vadd.f32 %v144, %v343
    %v345 = vpop.f32.mrb[0].mxu0
    %346 = vmatprep.mubr.bf16.mxu0 0
    %347 = vmatmul.mubr.bf16.gmra.mrb[0].mxu0 %v190
    %v348 = vpop.f32.mrb[0].mxu0
    %v349 = vadd.f32 %v144, %v348
    %v350 = vpop.f32.mrb[0].mxu0
    %v351 = vpop.f32.mrb[0].mxu0
    %v352 = vadd.f32 %v144, %v351
    %v353 = vpop.f32.mrb[0].mxu0
    %354 = vmatprep.mubr.bf16.mxu0 0
    %355 = vmatmul.mubr.bf16.gmra.mrb[0].mxu0 %v193
    %v356 = vpop.f32.mrb[0].mxu0
    %v357 = vadd.f32 %v144, %v356
    %v358 = vpop.f32.mrb[0].mxu0
    %v359 = vpop.f32.mrb[0].mxu0
    %v360 = vadd.f32 %v144, %v359
    %v361 = vpop.f32.mrb[0].mxu0
    %362 = vdwg.mxu0
    %v363 = vmax.f32 %v237, 0.0
    %v364 = vmax.f32 %v240, 0.0
    %v365 = vmax.f32 %v245, 0.0
    %v366 = vmax.f32 %v248, 0.0
    %v367 = vmax.f32 %v253, 0.0
    %v368 = vmax.f32 %v256, 0.0
    %v369 = vmax.f32 %v261, 0.0
    %v370 = vmax.f32 %v264, 0.0
    %v371 = vmax.f32 %v269, 0.0
    %v372 = vmax.f32 %v272, 0.0
    %v373 = vmax.f32 %v277, 0.0
    %v374 = vmax.f32 %v280, 0.0
    %v375 = vmax.f32 %v285, 0.0
    %v376 = vmax.f32 %v288, 0.0
    %v377 = vmax.f32 %v293, 0.0
    %v378 = vmax.f32 %v296, 0.0
    %v379 = vmax.f32 %v301, 0.0
    %v380 = vmax.f32 %v304, 0.0
    %v381 = vmax.f32 %v309, 0.0
    %v382 = vmax.f32 %v312, 0.0
    %v383 = vmax.f32 %v317, 0.0
    %v384 = vmax.f32 %v320, 0.0
    %v385 = vmax.f32 %v325, 0.0
    %v386 = vmax.f32 %v328, 0.0
    %v387 = vmax.f32 %v333, 0.0
    %v388 = vmax.f32 %v336, 0.0
    %v389 = vmax.f32 %v341, 0.0
    %v390 = vmax.f32 %v344, 0.0
    %v391 = vmax.f32 %v349, 0.0
    %v392 = vmax.f32 %v352, 0.0
    %v393 = vmax.f32 %v357, 0.0
    %v394 = vmax.f32 %v360, 0.0
    %v395 = vpack.c.bf16 %v364, %v363
    %v396 = vpack.c.bf16 %v366, %v365
    %v397 = vpack.c.bf16 %v368, %v367
    %v398 = vpack.c.bf16 %v370, %v369
    %v399 = vpack.c.bf16 %v372, %v371
    %v400 = vpack.c.bf16 %v374, %v373
    %v401 = vpack.c.bf16 %v376, %v375
    %v402 = vpack.c.bf16 %v378, %v377
    %v403 = vpack.c.bf16 %v380, %v379
    %v404 = vpack.c.bf16 %v382, %v381
    %v405 = vpack.c.bf16 %v384, %v383
    %v406 = vpack.c.bf16 %v386, %v385
    %v407 = vpack.c.bf16 %v388, %v387
    %v408 = vpack.c.bf16 %v390, %v389
    %v409 = vpack.c.bf16 %v392, %v391
    %v410 = vpack.c.bf16 %v394, %v393
    %v411 = vld [vmem:[#allocation2] sm:$0xf]
    %v412 = vld [vmem:[#allocation2 + $0x4] sm:$0xf]
    %v413 = vld [vmem:[#allocation2 + $0x8] sm:$0xf]
    %v414 = vld [vmem:[#allocation2 + $0xc] sm:$0xf]
    %v415 = vld [vmem:[#allocation2 + $0x10] sm:$0xf]
    %v416 = vld [vmem:[#allocation2 + $0x14] sm:$0xf]
    %v417 = vld [vmem:[#allocation2 + $0x18] sm:$0xf]
    %v418 = vld [vmem:[#allocation2 + $0x1c] sm:$0xf]
    %v419 = vld [vmem:[%s4] sm:$0x1]
    %v421 = vlaneseq
    %v422 = vshrl.u32 %v421, 7
    %v423 = vsub.s32 0, %v422
    %v424 = vrot.slane %v419, %v423
    %v434 = vunpack.c.l.b16 %v411
    %v435 = vunpack.c.l.b16 %v412
    %v436 = vunpack.c.l.b16 %v413
    %v437 = vunpack.c.l.b16 %v414
    %v438 = vunpack.c.l.b16 %v415
    %v439 = vunpack.c.l.b16 %v416
    %v440 = vunpack.c.l.b16 %v417
    %v441 = vunpack.c.l.b16 %v418
    %v442 = vpack.c.b16 %v435, %v434
    %v443 = vpack.c.b16 %v437, %v436
    %v444 = vpack.c.b16 %v439, %v438
    %v445 = vpack.c.b16 %v441, %v440
    %vm450 = vcmask 523264
    %v452 = vsel %vm450, %v395, 0
    %v455 = vsel %vm450, %v396, 0
    %v458 = vsel %vm450, %v397, 0
    %v461 = vsel %vm450, %v398, 0
    %v464 = vsel %vm450, %v399, 0
    %v467 = vsel %vm450, %v400, 0
    %v470 = vsel %vm450, %v401, 0
    %v473 = vsel %vm450, %v402, 0
    %v476 = vsel %vm450, %v403, 0
    %v479 = vsel %vm450, %v404, 0
    %v482 = vsel %vm450, %v405, 0
    %v485 = vsel %vm450, %v406, 0
    %v488 = vsel %vm450, %v407, 0
    %v491 = vsel %vm450, %v408, 0
    %v494 = vsel %vm450, %v409, 0
    %v497 = vsel %vm450, %v410, 0
    %499 = vmatprep.subr.bf16.mxu0 0
    %500 = vmatpush1.bf16.msra.mxu0 %v442
    %501 = vmatprep.subr.bf16.mxu0 0
    %502 = vmatpush1.bf16.msra.mxu0 %v443
    %503 = vmatprep.subr.bf16.mxu0 0
    %504 = vmatpush1.bf16.msra.mxu0 %v444
    %505 = vmatprep.subr.bf16.mxu0 0
    %506 = vmatpush1.bf16.msra.mxu0 %v445
    %507 = vmatprep.subr.bf16.mxu0 0
    %508 = vmatpush1.bf16.msra.mxu0 0
    %509 = vmatprep.subr.bf16.mxu0 0
    %510 = vmatpush1.bf16.msra.mxu0 0
    %511 = vmatprep.subr.bf16.mxu0 0
    %512 = vmatpush1.bf16.msra.mxu0 0
    %513 = vmatprep.subr.bf16.mxu0 0
    %514 = vmatpush1.bf16.msra.mxu0 0
    %515 = vmatprep.subr.bf16.mxu0 0
    %516 = vmatpush1.bf16.msra.mxu0 0
    %517 = vmatprep.subr.bf16.mxu0 0
    %518 = vmatpush1.bf16.msra.mxu0 0
    %519 = vmatprep.subr.bf16.mxu0 0
    %520 = vmatpush1.bf16.msra.mxu0 0
    %521 = vmatprep.subr.bf16.mxu0 0
    %522 = vmatpush1.bf16.msra.mxu0 0
    %523 = vmatprep.subr.bf16.mxu0 0
    %524 = vmatpush1.bf16.msra.mxu0 0
    %525 = vmatprep.subr.bf16.mxu0 0
    %526 = vmatpush1.bf16.msra.mxu0 0
    %527 = vmatprep.subr.bf16.mxu0 0
    %528 = vmatpush1.bf16.msra.mxu0 0
    %529 = vmatprep.subr.bf16.mxu0 0
    %530 = vmatpush1.bf16.msra.mxu0 0
    %531 = vmatprep.mubr.bf16.mxu0 0
    %532 = vmatmul.mubr.bf16.gmra.mrb[0].mxu0 %v452
    %v533 = vpop.f32.mrb[0].mxu0
    %v534 = vadd.f32 %v424, %v533
    %v535 = vpop.f32.mrb[0].mxu0
    %v536 = vpop.f32.mrb[0].mxu0
    %v537 = vadd.f32 %v424, %v536
    %v538 = vpop.f32.mrb[0].mxu0
    %539 = vmatprep.mubr.bf16.mxu0 0
    %540 = vmatmul.mubr.bf16.gmra.mrb[0].mxu0 %v455
    %v541 = vpop.f32.mrb[0].mxu0
    %v542 = vadd.f32 %v424, %v541
    %v543 = vpop.f32.mrb[0].mxu0
    %v544 = vpop.f32.mrb[0].mxu0
    %v545 = vadd.f32 %v424, %v544
    %v546 = vpop.f32.mrb[0].mxu0
    %547 = vmatprep.mubr.bf16.mxu0 0
    %548 = vmatmul.mubr.bf16.gmra.mrb[0].mxu0 %v458
    %v549 = vpop.f32.mrb[0].mxu0
    %v550 = vadd.f32 %v424, %v549
    %v551 = vpop.f32.mrb[0].mxu0
    %v552 = vpop.f32.mrb[0].mxu0
    %v553 = vadd.f32 %v424, %v552
    %v554 = vpop.f32.mrb[0].mxu0
    %555 = vmatprep.mubr.bf16.mxu0 0
    %556 = vmatmul.mubr.bf16.gmra.mrb[0].mxu0 %v461
    %v557 = vpop.f32.mrb[0].mxu0
    %v558 = vadd.f32 %v424, %v557
    %v559 = vpop.f32.mrb[0].mxu0
    %v560 = vpop.f32.mrb[0].mxu0
    %v561 = vadd.f32 %v424, %v560
    %v562 = vpop.f32.mrb[0].mxu0
    %563 = vmatprep.mubr.bf16.mxu0 0
    %564 = vmatmul.mubr.bf16.gmra.mrb[0].mxu0 %v464
    %v565 = vpop.f32.mrb[0].mxu0
    %v566 = vadd.f32 %v424, %v565
    %v567 = vpop.f32.mrb[0].mxu0
    %v568 = vpop.f32.mrb[0].mxu0
    %v569 = vadd.f32 %v424, %v568
    %v570 = vpop.f32.mrb[0].mxu0
    %571 = vmatprep.mubr.bf16.mxu0 0
    %572 = vmatmul.mubr.bf16.gmra.mrb[0].mxu0 %v467
    %v573 = vpop.f32.mrb[0].mxu0
    %v574 = vadd.f32 %v424, %v573
    %v575 = vpop.f32.mrb[0].mxu0
    %v576 = vpop.f32.mrb[0].mxu0
    %v577 = vadd.f32 %v424, %v576
    %v578 = vpop.f32.mrb[0].mxu0
    %579 = vmatprep.mubr.bf16.mxu0 0
    %580 = vmatmul.mubr.bf16.gmra.mrb[0].mxu0 %v470
    %v581 = vpop.f32.mrb[0].mxu0
    %v582 = vadd.f32 %v424, %v581
    %v583 = vpop.f32.mrb[0].mxu0
    %v584 = vpop.f32.mrb[0].mxu0
    %v585 = vadd.f32 %v424, %v584
    %v586 = vpop.f32.mrb[0].mxu0
    %587 = vmatprep.mubr.bf16.mxu0 0
    %588 = vmatmul.mubr.bf16.gmra.mrb[0].mxu0 %v473
    %v589 = vpop.f32.mrb[0].mxu0
    %v590 = vadd.f32 %v424, %v589
    %v591 = vpop.f32.mrb[0].mxu0
    %v592 = vpop.f32.mrb[0].mxu0
    %v593 = vadd.f32 %v424, %v592
    %v594 = vpop.f32.mrb[0].mxu0
    %595 = vmatprep.mubr.bf16.mxu0 0
    %596 = vmatmul.mubr.bf16.gmra.mrb[0].mxu0 %v476
    %v597 = vpop.f32.mrb[0].mxu0
    %v598 = vadd.f32 %v424, %v597
    %v599 = vpop.f32.mrb[0].mxu0
    %v600 = vpop.f32.mrb[0].mxu0
    %v601 = vadd.f32 %v424, %v600
    %v602 = vpop.f32.mrb[0].mxu0
    %603 = vmatprep.mubr.bf16.mxu0 0
    %604 = vmatmul.mubr.bf16.gmra.mrb[0].mxu0 %v479
    %v605 = vpop.f32.mrb[0].mxu0
    %v606 = vadd.f32 %v424, %v605
    %v607 = vpop.f32.mrb[0].mxu0
    %v608 = vpop.f32.mrb[0].mxu0
    %v609 = vadd.f32 %v424, %v608
    %v610 = vpop.f32.mrb[0].mxu0
    %611 = vmatprep.mubr.bf16.mxu0 0
    %612 = vmatmul.mubr.bf16.gmra.mrb[0].mxu0 %v482
    %v613 = vpop.f32.mrb[0].mxu0
    %v614 = vadd.f32 %v424, %v613
    %v615 = vpop.f32.mrb[0].mxu0
    %v616 = vpop.f32.mrb[0].mxu0
    %v617 = vadd.f32 %v424, %v616
    %v618 = vpop.f32.mrb[0].mxu0
    %619 = vmatprep.mubr.bf16.mxu0 0
    %620 = vmatmul.mubr.bf16.gmra.mrb[0].mxu0 %v485
    %v621 = vpop.f32.mrb[0].mxu0
    %v622 = vadd.f32 %v424, %v621
    %v623 = vpop.f32.mrb[0].mxu0
    %v624 = vpop.f32.mrb[0].mxu0
    %v625 = vadd.f32 %v424, %v624
    %v626 = vpop.f32.mrb[0].mxu0
    %627 = vmatprep.mubr.bf16.mxu0 0
    %628 = vmatmul.mubr.bf16.gmra.mrb[0].mxu0 %v488
    %v629 = vpop.f32.mrb[0].mxu0
    %v630 = vadd.f32 %v424, %v629
    %v631 = vpop.f32.mrb[0].mxu0
    %v632 = vpop.f32.mrb[0].mxu0
    %v633 = vadd.f32 %v424, %v632
    %v634 = vpop.f32.mrb[0].mxu0
    %635 = vmatprep.mubr.bf16.mxu0 0
    %636 = vmatmul.mubr.bf16.gmra.mrb[0].mxu0 %v491
    %v637 = vpop.f32.mrb[0].mxu0
    %v638 = vadd.f32 %v424, %v637
    %v639 = vpop.f32.mrb[0].mxu0
    %v640 = vpop.f32.mrb[0].mxu0
    %v641 = vadd.f32 %v424, %v640
    %v642 = vpop.f32.mrb[0].mxu0
    %643 = vmatprep.mubr.bf16.mxu0 0
    %644 = vmatmul.mubr.bf16.gmra.mrb[0].mxu0 %v494
    %v645 = vpop.f32.mrb[0].mxu0
    %v646 = vadd.f32 %v424, %v645
    %v647 = vpop.f32.mrb[0].mxu0
    %v648 = vpop.f32.mrb[0].mxu0
    %v649 = vadd.f32 %v424, %v648
    %v650 = vpop.f32.mrb[0].mxu0
    %651 = vmatprep.mubr.bf16.mxu0 0
    %652 = vmatmul.mubr.bf16.gmra.mrb[0].mxu0 %v497
    %v653 = vpop.f32.mrb[0].mxu0
    %v654 = vadd.f32 %v424, %v653
    %v655 = vpop.f32.mrb[0].mxu0
    %v656 = vpop.f32.mrb[0].mxu0
    %v657 = vadd.f32 %v424, %v656
    %v658 = vpop.f32.mrb[0].mxu0
    %659 = vdwg.mxu0
    %v660 = vmax.f32 %v534, 0.0
    %v661 = vmax.f32 %v537, 0.0
    %v662 = vmax.f32 %v542, 0.0
    %v663 = vmax.f32 %v545, 0.0
    %v664 = vmax.f32 %v550, 0.0
    %v665 = vmax.f32 %v553, 0.0
    %v666 = vmax.f32 %v558, 0.0
    %v667 = vmax.f32 %v561, 0.0
    %v668 = vmax.f32 %v566, 0.0
    %v669 = vmax.f32 %v569, 0.0
    %v670 = vmax.f32 %v574, 0.0
    %v671 = vmax.f32 %v577, 0.0
    %v672 = vmax.f32 %v582, 0.0
    %v673 = vmax.f32 %v585, 0.0
    %v674 = vmax.f32 %v590, 0.0
    %v675 = vmax.f32 %v593, 0.0
    %v676 = vmax.f32 %v598, 0.0
    %v677 = vmax.f32 %v601, 0.0
    %v678 = vmax.f32 %v606, 0.0
    %v679 = vmax.f32 %v609, 0.0
    %v680 = vmax.f32 %v614, 0.0
    %v681 = vmax.f32 %v617, 0.0
    %v682 = vmax.f32 %v622, 0.0
    %v683 = vmax.f32 %v625, 0.0
    %v684 = vmax.f32 %v630, 0.0
    %v685 = vmax.f32 %v633, 0.0
    %v686 = vmax.f32 %v638, 0.0
    %v687 = vmax.f32 %v641, 0.0
    %v688 = vmax.f32 %v646, 0.0
    %v689 = vmax.f32 %v649, 0.0
    %v690 = vmax.f32 %v654, 0.0
    %v691 = vmax.f32 %v657, 0.0
    %v692 = vpack.c.bf16 %v661, %v660
    %v693 = vpack.c.bf16 %v663, %v662
    %v694 = vpack.c.bf16 %v665, %v664
    %v695 = vpack.c.bf16 %v667, %v666
    %v696 = vpack.c.bf16 %v669, %v668
    %v697 = vpack.c.bf16 %v671, %v670
    %v698 = vpack.c.bf16 %v673, %v672
    %v699 = vpack.c.bf16 %v675, %v674
    %v700 = vpack.c.bf16 %v677, %v676
    %v701 = vpack.c.bf16 %v679, %v678
    %v702 = vpack.c.bf16 %v681, %v680
    %v703 = vpack.c.bf16 %v683, %v682
    %v704 = vpack.c.bf16 %v685, %v684
    %v705 = vpack.c.bf16 %v687, %v686
    %v706 = vpack.c.bf16 %v689, %v688
    %v707 = vpack.c.bf16 %v691, %v690
    %v708 = vld [vmem:[#allocation5] sm:$0xff]
    %v709 = vld [vmem:[#allocation5 + $0x20] sm:$0xff]
    %v710 = vld [vmem:[#allocation5 + $0x40] sm:$0xff]
    %v711 = vld [vmem:[#allocation5 + $0x60] sm:$0xff]
    %v712 = vld [vmem:[#allocation5 + $0x80] sm:$0xff]
    %v713 = vld [vmem:[#allocation5 + $0xa0] sm:$0xff]
    %v714 = vld [vmem:[#allocation5 + $0xc0] sm:$0xff]
    %v715 = vld [vmem:[#allocation5 + $0xe0] sm:$0xff]
    %v716 = vld [vmem:[#allocation5 + $0x100] sm:$0xff]
    %v717 = vld [vmem:[#allocation5 + $0x120] sm:$0xff]
    %v718 = vld [vmem:[#allocation5 + $0x140] sm:$0xff]
    %v719 = vld [vmem:[#allocation5 + $0x160] sm:$0xff]
    %v720 = vld [vmem:[#allocation5 + $0x180] sm:$0xff]
    %v721 = vld [vmem:[#allocation5 + $0x1a0] sm:$0xff]
    %v722 = vld [vmem:[#allocation5 + $0x1c0] sm:$0xff]
    %v723 = vld [vmem:[#allocation5 + $0x1e0] sm:$0xff]
    %v740 = vunpack.c.l.b16 %v708
    %v741 = vunpack.c.h.b16 %v708
    %v742 = vunpack.c.l.b16 %v709
    %v743 = vunpack.c.h.b16 %v709
    %v744 = vunpack.c.l.b16 %v710
    %v745 = vunpack.c.h.b16 %v710
    %v746 = vunpack.c.l.b16 %v711
    %v747 = vunpack.c.h.b16 %v711
    %v748 = vunpack.c.l.b16 %v712
    %v749 = vunpack.c.h.b16 %v712
    %v750 = vunpack.c.l.b16 %v713
    %v751 = vunpack.c.h.b16 %v713
    %v752 = vunpack.c.l.b16 %v714
    %v753 = vunpack.c.h.b16 %v714
    %v754 = vunpack.c.l.b16 %v715
    %v755 = vunpack.c.h.b16 %v715
    %v756 = vunpack.c.l.b16 %v716
    %v757 = vunpack.c.h.b16 %v716
    %v758 = vunpack.c.l.b16 %v717
    %v759 = vunpack.c.h.b16 %v717
    %v760 = vunpack.c.l.b16 %v718
    %v761 = vunpack.c.h.b16 %v718
    %v762 = vunpack.c.l.b16 %v719
    %v763 = vunpack.c.h.b16 %v719
    %v764 = vunpack.c.l.b16 %v720
    %v765 = vunpack.c.h.b16 %v720
    %v766 = vunpack.c.l.b16 %v721
    %v767 = vunpack.c.h.b16 %v721
    %v768 = vunpack.c.l.b16 %v722
    %v769 = vunpack.c.h.b16 %v722
    %v770 = vunpack.c.l.b16 %v723
    %v771 = vunpack.c.h.b16 %v723
    %v772 = vpack.c.b16 %v742, %v740
    %v773 = vpack.c.b16 %v743, %v741
    %v774 = vpack.c.b16 %v746, %v744
    %v775 = vpack.c.b16 %v747, %v745
    %v776 = vpack.c.b16 %v750, %v748
    %v777 = vpack.c.b16 %v751, %v749
    %v778 = vpack.c.b16 %v754, %v752
    %v779 = vpack.c.b16 %v755, %v753
    %v780 = vpack.c.b16 %v758, %v756
    %v781 = vpack.c.b16 %v759, %v757
    %v782 = vpack.c.b16 %v762, %v760
    %v783 = vpack.c.b16 %v763, %v761
    %v784 = vpack.c.b16 %v766, %v764
    %v785 = vpack.c.b16 %v767, %v765
    %v786 = vpack.c.b16 %v770, %v768
    %v787 = vpack.c.b16 %v771, %v769
    %804 = vmatprep.subr.bf16.mxu0 %v773
    %805 = vmatpush1.bf16.msra.mxu0 %v772
    %806 = vmatprep.subr.bf16.mxu0 %v775
    %807 = vmatpush1.bf16.msra.mxu0 %v774
    %808 = vmatprep.subr.bf16.mxu0 %v777
    %809 = vmatpush1.bf16.msra.mxu0 %v776
    %810 = vmatprep.subr.bf16.mxu0 %v779
    %811 = vmatpush1.bf16.msra.mxu0 %v778
    %812 = vmatprep.subr.bf16.mxu0 %v781
    %813 = vmatpush1.bf16.msra.mxu0 %v780
    %814 = vmatprep.subr.bf16.mxu0 %v783
    %815 = vmatpush1.bf16.msra.mxu0 %v782
    %816 = vmatprep.subr.bf16.mxu0 %v785
    %817 = vmatpush1.bf16.msra.mxu0 %v784
    %818 = vmatprep.subr.bf16.mxu0 %v787
    %819 = vmatpush1.bf16.msra.mxu0 %v786
    %820 = vmatprep.subr.bf16.mxu0 0
    %821 = vmatpush1.bf16.msra.mxu0 0
    %822 = vmatprep.subr.bf16.mxu0 0
    %823 = vmatpush1.bf16.msra.mxu0 0
    %824 = vmatprep.subr.bf16.mxu0 0
    %825 = vmatpush1.bf16.msra.mxu0 0
    %826 = vmatprep.subr.bf16.mxu0 0
    %827 = vmatpush1.bf16.msra.mxu0 0
    %828 = vmatprep.subr.bf16.mxu0 0
    %829 = vmatpush1.bf16.msra.mxu0 0
    %830 = vmatprep.subr.bf16.mxu0 0
    %831 = vmatpush1.bf16.msra.mxu0 0
    %832 = vmatprep.subr.bf16.mxu0 0
    %833 = vmatpush1.bf16.msra.mxu0 0
    %834 = vmatprep.subr.bf16.mxu0 0
    %835 = vmatpush1.bf16.msra.mxu0 0
    %836 = vmatprep.mubr.bf16.mxu0 0
    %837 = vmatmul.mubr.bf16.gmra.mrb[0].mxu0 %v692
    %v838 = vpop.f32.mrb[0].mxu0
    %v839 = vadd.f32 0.0, %v838
    %v840 = vpop.f32.mrb[0].mxu0
    %v841 = vadd.f32 0.0, %v840
    %v842 = vpop.f32.mrb[0].mxu0
    %v843 = vadd.f32 0.0, %v842
    %v844 = vpop.f32.mrb[0].mxu0
    %v845 = vadd.f32 0.0, %v844
    %846 = vmatprep.mubr.bf16.mxu0 0
    %847 = vmatmul.mubr.bf16.gmra.mrb[0].mxu0 %v693
    %v848 = vpop.f32.mrb[0].mxu0
    %v849 = vadd.f32 0.0, %v848
    %v850 = vpop.f32.mrb[0].mxu0
    %v851 = vadd.f32 0.0, %v850
    %v852 = vpop.f32.mrb[0].mxu0
    %v853 = vadd.f32 0.0, %v852
    %v854 = vpop.f32.mrb[0].mxu0
    %v855 = vadd.f32 0.0, %v854
    %856 = vmatprep.mubr.bf16.mxu0 0
    %857 = vmatmul.mubr.bf16.gmra.mrb[0].mxu0 %v694
    %v858 = vpop.f32.mrb[0].mxu0
    %v859 = vadd.f32 0.0, %v858
    %v860 = vpop.f32.mrb[0].mxu0
    %v861 = vadd.f32 0.0, %v860
    %v862 = vpop.f32.mrb[0].mxu0
    %v863 = vadd.f32 0.0, %v862
    %v864 = vpop.f32.mrb[0].mxu0
    %v865 = vadd.f32 0.0, %v864
    %866 = vmatprep.mubr.bf16.mxu0 0
    %867 = vmatmul.mubr.bf16.gmra.mrb[0].mxu0 %v695
    %v868 = vpop.f32.mrb[0].mxu0
    %v869 = vadd.f32 0.0, %v868
    %v870 = vpop.f32.mrb[0].mxu0
    %v871 = vadd.f32 0.0, %v870
    %v872 = vpop.f32.mrb[0].mxu0
    %v873 = vadd.f32 0.0, %v872
    %v874 = vpop.f32.mrb[0].mxu0
    %v875 = vadd.f32 0.0, %v874
    %876 = vmatprep.mubr.bf16.mxu0 0
    %877 = vmatmul.mubr.bf16.gmra.mrb[0].mxu0 %v696
    %v878 = vpop.f32.mrb[0].mxu0
    %v879 = vadd.f32 0.0, %v878
    %v880 = vpop.f32.mrb[0].mxu0
    %v881 = vadd.f32 0.0, %v880
    %v882 = vpop.f32.mrb[0].mxu0
    %v883 = vadd.f32 0.0, %v882
    %v884 = vpop.f32.mrb[0].mxu0
    %v885 = vadd.f32 0.0, %v884
    %886 = vmatprep.mubr.bf16.mxu0 0
    %887 = vmatmul.mubr.bf16.gmra.mrb[0].mxu0 %v697
    %v888 = vpop.f32.mrb[0].mxu0
    %v889 = vadd.f32 0.0, %v888
    %v890 = vpop.f32.mrb[0].mxu0
    %v891 = vadd.f32 0.0, %v890
    %v892 = vpop.f32.mrb[0].mxu0
    %v893 = vadd.f32 0.0, %v892
    %v894 = vpop.f32.mrb[0].mxu0
    %v895 = vadd.f32 0.0, %v894
    %896 = vmatprep.mubr.bf16.mxu0 0
    %897 = vmatmul.mubr.bf16.gmra.mrb[0].mxu0 %v698
    %v898 = vpop.f32.mrb[0].mxu0
    %v899 = vadd.f32 0.0, %v898
    %v900 = vpop.f32.mrb[0].mxu0
    %v901 = vadd.f32 0.0, %v900
    %v902 = vpop.f32.mrb[0].mxu0
    %v903 = vadd.f32 0.0, %v902
    %v904 = vpop.f32.mrb[0].mxu0
    %v905 = vadd.f32 0.0, %v904
    %906 = vmatprep.mubr.bf16.mxu0 0
    %907 = vmatmul.mubr.bf16.gmra.mrb[0].mxu0 %v699
    %v908 = vpop.f32.mrb[0].mxu0
    %v909 = vadd.f32 0.0, %v908
    %v910 = vpop.f32.mrb[0].mxu0
    %v911 = vadd.f32 0.0, %v910
    %v912 = vpop.f32.mrb[0].mxu0
    %v913 = vadd.f32 0.0, %v912
    %v914 = vpop.f32.mrb[0].mxu0
    %v915 = vadd.f32 0.0, %v914
    %916 = vmatprep.mubr.bf16.mxu0 0
    %917 = vmatmul.mubr.bf16.gmra.mrb[0].mxu0 %v700
    %v918 = vpop.f32.mrb[0].mxu0
    %v919 = vadd.f32 0.0, %v918
    %v920 = vpop.f32.mrb[0].mxu0
    %v921 = vadd.f32 0.0, %v920
    %v922 = vpop.f32.mrb[0].mxu0
    %v923 = vadd.f32 0.0, %v922
    %v924 = vpop.f32.mrb[0].mxu0
    %v925 = vadd.f32 0.0, %v924
    %926 = vmatprep.mubr.bf16.mxu0 0
    %927 = vmatmul.mubr.bf16.gmra.mrb[0].mxu0 %v701
    %v928 = vpop.f32.mrb[0].mxu0
    %v929 = vadd.f32 0.0, %v928
    %v930 = vpop.f32.mrb[0].mxu0
    %v931 = vadd.f32 0.0, %v930
    %v932 = vpop.f32.mrb[0].mxu0
    %v933 = vadd.f32 0.0, %v932
    %v934 = vpop.f32.mrb[0].mxu0
    %v935 = vadd.f32 0.0, %v934
    %936 = vmatprep.mubr.bf16.mxu0 0
    %937 = vmatmul.mubr.bf16.gmra.mrb[0].mxu0 %v702
    %v938 = vpop.f32.mrb[0].mxu0
    %v939 = vadd.f32 0.0, %v938
    %v940 = vpop.f32.mrb[0].mxu0
    %v941 = vadd.f32 0.0, %v940
    %v942 = vpop.f32.mrb[0].mxu0
    %v943 = vadd.f32 0.0, %v942
    %v944 = vpop.f32.mrb[0].mxu0
    %v945 = vadd.f32 0.0, %v944
    %946 = vmatprep.mubr.bf16.mxu0 0
    %947 = vmatmul.mubr.bf16.gmra.mrb[0].mxu0 %v703
    %v948 = vpop.f32.mrb[0].mxu0
    %v949 = vadd.f32 0.0, %v948
    %v950 = vpop.f32.mrb[0].mxu0
    %v951 = vadd.f32 0.0, %v950
    %v952 = vpop.f32.mrb[0].mxu0
    %v953 = vadd.f32 0.0, %v952
    %v954 = vpop.f32.mrb[0].mxu0
    %v955 = vadd.f32 0.0, %v954
    %956 = vmatprep.mubr.bf16.mxu0 0
    %957 = vmatmul.mubr.bf16.gmra.mrb[0].mxu0 %v704
    %v958 = vpop.f32.mrb[0].mxu0
    %v959 = vadd.f32 0.0, %v958
    %v960 = vpop.f32.mrb[0].mxu0
    %v961 = vadd.f32 0.0, %v960
    %v962 = vpop.f32.mrb[0].mxu0
    %v963 = vadd.f32 0.0, %v962
    %v964 = vpop.f32.mrb[0].mxu0
    %v965 = vadd.f32 0.0, %v964
    %966 = vmatprep.mubr.bf16.mxu0 0
    %967 = vmatmul.mubr.bf16.gmra.mrb[0].mxu0 %v705
    %v968 = vpop.f32.mrb[0].mxu0
    %v969 = vadd.f32 0.0, %v968
    %v970 = vpop.f32.mrb[0].mxu0
    %v971 = vadd.f32 0.0, %v970
    %v972 = vpop.f32.mrb[0].mxu0
    %v973 = vadd.f32 0.0, %v972
    %v974 = vpop.f32.mrb[0].mxu0
    %v975 = vadd.f32 0.0, %v974
    %976 = vmatprep.mubr.bf16.mxu0 0
    %977 = vmatmul.mubr.bf16.gmra.mrb[0].mxu0 %v706
    %v978 = vpop.f32.mrb[0].mxu0
    %v979 = vadd.f32 0.0, %v978
    %v980 = vpop.f32.mrb[0].mxu0
    %v981 = vadd.f32 0.0, %v980
    %v982 = vpop.f32.mrb[0].mxu0
    %v983 = vadd.f32 0.0, %v982
    %v984 = vpop.f32.mrb[0].mxu0
    %v985 = vadd.f32 0.0, %v984
    %986 = vmatprep.mubr.bf16.mxu0 0
    %987 = vmatmul.mubr.bf16.gmra.mrb[0].mxu0 %v707
    %v988 = vpop.f32.mrb[0].mxu0
    %v989 = vadd.f32 0.0, %v988
    %v990 = vpop.f32.mrb[0].mxu0
    %v991 = vadd.f32 0.0, %v990
    %v992 = vpop.f32.mrb[0].mxu0
    %v993 = vadd.f32 0.0, %v992
    %v994 = vpop.f32.mrb[0].mxu0
    %v995 = vadd.f32 0.0, %v994
    %996 = vdwg.mxu0
    %v997 = vmax.f32 %v839, %v843
    %v998 = vmax.f32 %v997, %v849
    %v999 = vmax.f32 %v998, %v853
    %v1000 = vmax.f32 %v999, %v859
    %v1001 = vmax.f32 %v1000, %v863
    %v1002 = vmax.f32 %v1001, %v869
    %v1003 = vmax.f32 %v1002, %v873
    %v1004 = vmax.f32 %v1003, %v879
    %v1005 = vmax.f32 %v1004, %v883
    %v1006 = vmax.f32 %v1005, %v889
    %v1007 = vmax.f32 %v1006, %v893
    %v1008 = vmax.f32 %v1007, %v899
    %v1009 = vmax.f32 %v1008, %v903
    %v1010 = vmax.f32 %v1009, %v909
    %v1011 = vmax.f32 %v1010, %v913
    %v1012 = vrot.slane %v1011, 4
    %v1013 = vmax.f32 %v1011, %v1012
    %v1014 = vrot.slane %v1013, 2
    %v1015 = vmax.f32 %v1013, %v1014
    %v1016 = vrot.slane %v1015, 1
    %v1017 = vmax.f32 %v1015, %v1016
    %v1018 = vmax.f32 %v841, %v845
    %v1019 = vmax.f32 %v1018, %v851
    %v1020 = vmax.f32 %v1019, %v855
    %v1021 = vmax.f32 %v1020, %v861
    %v1022 = vmax.f32 %v1021, %v865
    %v1023 = vmax.f32 %v1022, %v871
    %v1024 = vmax.f32 %v1023, %v875
    %v1025 = vmax.f32 %v1024, %v881
    %v1026 = vmax.f32 %v1025, %v885
    %v1027 = vmax.f32 %v1026, %v891
    %v1028 = vmax.f32 %v1027, %v895
    %v1029 = vmax.f32 %v1028, %v901
    %v1030 = vmax.f32 %v1029, %v905
    %v1031 = vmax.f32 %v1030, %v911
    %v1032 = vmax.f32 %v1031, %v915
    %v1033 = vrot.slane %v1032, 4
    %v1034 = vmax.f32 %v1032, %v1033
    %v1035 = vrot.slane %v1034, 2
    %v1036 = vmax.f32 %v1034, %v1035
    %v1037 = vrot.slane %v1036, 1
    %v1038 = vmax.f32 %v1036, %v1037
    %v1039 = vmax.f32 %v919, %v923
    %v1040 = vmax.f32 %v1039, %v929
    %v1041 = vmax.f32 %v1040, %v933
    %v1042 = vmax.f32 %v1041, %v939
    %v1043 = vmax.f32 %v1042, %v943
    %v1044 = vmax.f32 %v1043, %v949
    %v1045 = vmax.f32 %v1044, %v953
    %v1046 = vmax.f32 %v1045, %v959
    %v1047 = vmax.f32 %v1046, %v963
    %v1048 = vmax.f32 %v1047, %v969
    %v1049 = vmax.f32 %v1048, %v973
    %v1050 = vmax.f32 %v1049, %v979
    %v1051 = vmax.f32 %v1050, %v983
    %v1052 = vmax.f32 %v1051, %v989
    %v1053 = vmax.f32 %v1052, %v993
    %v1054 = vrot.slane %v1053, 4
    %v1055 = vmax.f32 %v1053, %v1054
    %v1056 = vrot.slane %v1055, 2
    %v1057 = vmax.f32 %v1055, %v1056
    %v1058 = vrot.slane %v1057, 1
    %v1059 = vmax.f32 %v1057, %v1058
    %v1060 = vmax.f32 %v921, %v925
    %v1061 = vmax.f32 %v1060, %v931
    %v1062 = vmax.f32 %v1061, %v935
    %v1063 = vmax.f32 %v1062, %v941
    %v1064 = vmax.f32 %v1063, %v945
    %v1065 = vmax.f32 %v1064, %v951
    %v1066 = vmax.f32 %v1065, %v955
    %v1067 = vmax.f32 %v1066, %v961
    %v1068 = vmax.f32 %v1067, %v965
    %v1069 = vmax.f32 %v1068, %v971
    %v1070 = vmax.f32 %v1069, %v975
    %v1071 = vmax.f32 %v1070, %v981
    %v1072 = vmax.f32 %v1071, %v985
    %v1073 = vmax.f32 %v1072, %v991
    %v1074 = vmax.f32 %v1073, %v995
    %v1075 = vrot.slane %v1074, 4
    %v1076 = vmax.f32 %v1074, %v1075
    %v1077 = vrot.slane %v1076, 2
    %v1078 = vmax.f32 %v1076, %v1077
    %v1079 = vrot.slane %v1078, 1
    %v1080 = vmax.f32 %v1078, %v1079
    %v1081 = vld [vmem:[%s6] sm:$0x3]
    %v1083 = vlaneseq
    %v1084 = vshrl.u32 %v1083, 7
    %v1085 = vsub.s32 0, %v1084
    %v1086 = vrot.slane %v1081, %v1085
    %v1087 = vlaneseq
    %v1088 = vshrl.u32 %v1087, 7
    %v1089 = vsub.s32 1, %v1088
    %v1090 = vrot.slane %v1081, %v1089
    %v1093 = vadd.f32 %v1017, %v1086
    %v1094 = vadd.f32 %v1038, %v1090
    %v1095 = vadd.f32 %v1059, %v1086
    %v1096 = vadd.f32 %v1080, %v1090
    %v1097 = vmax.f32 %v1093, 0.0
    %v1098 = vmax.f32 %v1094, 0.0
    %v1099 = vmax.f32 %v1095, 0.0
    %v1100 = vmax.f32 %v1096, 0.0
    %v1101 = vld [vmem:[#allocation5 + $0x8] sm:$0xff]
    %v1102 = vld [vmem:[#allocation5 + $0x28] sm:$0xff]
    %v1103 = vld [vmem:[#allocation5 + $0x48] sm:$0xff]
    %v1104 = vld [vmem:[#allocation5 + $0x68] sm:$0xff]
    %v1105 = vld [vmem:[#allocation5 + $0x88] sm:$0xff]
    %v1106 = vld [vmem:[#allocation5 + $0xa8] sm:$0xff]
    %v1107 = vld [vmem:[#allocation5 + $0xc8] sm:$0xff]
    %v1108 = vld [vmem:[#allocation5 + $0xe8] sm:$0xff]
    %v1109 = vld [vmem:[#allocation5 + $0x108] sm:$0xff]
    %v1110 = vld [vmem:[#allocation5 + $0x128] sm:$0xff]
    %v1111 = vld [vmem:[#allocation5 + $0x148] sm:$0xff]
    %v1112 = vld [vmem:[#allocation5 + $0x168] sm:$0xff]
    %v1113 = vld [vmem:[#allocation5 + $0x188] sm:$0xff]
    %v1114 = vld [vmem:[#allocation5 + $0x1a8] sm:$0xff]
    %v1115 = vld [vmem:[#allocation5 + $0x1c8] sm:$0xff]
    %v1116 = vld [vmem:[#allocation5 + $0x1e8] sm:$0xff]
    %v1133 = vunpack.c.l.b16 %v1101
    %v1134 = vunpack.c.h.b16 %v1101
    %v1135 = vunpack.c.l.b16 %v1102
    %v1136 = vunpack.c.h.b16 %v1102
    %v1137 = vunpack.c.l.b16 %v1103
    %v1138 = vunpack.c.h.b16 %v1103
    %v1139 = vunpack.c.l.b16 %v1104
    %v1140 = vunpack.c.h.b16 %v1104
    %v1141 = vunpack.c.l.b16 %v1105
    %v1142 = vunpack.c.h.b16 %v1105
    %v1143 = vunpack.c.l.b16 %v1106
    %v1144 = vunpack.c.h.b16 %v1106
    %v1145 = vunpack.c.l.b16 %v1107
    %v1146 = vunpack.c.h.b16 %v1107
    %v1147 = vunpack.c.l.b16 %v1108
    %v1148 = vunpack.c.h.b16 %v1108
    %v1149 = vunpack.c.l.b16 %v1109
    %v1150 = vunpack.c.h.b16 %v1109
    %v1151 = vunpack.c.l.b16 %v1110
    %v1152 = vunpack.c.h.b16 %v1110
    %v1153 = vunpack.c.l.b16 %v1111
    %v1154 = vunpack.c.h.b16 %v1111
    %v1155 = vunpack.c.l.b16 %v1112
    %v1156 = vunpack.c.h.b16 %v1112
    %v1157 = vunpack.c.l.b16 %v1113
    %v1158 = vunpack.c.h.b16 %v1113
    %v1159 = vunpack.c.l.b16 %v1114
    %v1160 = vunpack.c.h.b16 %v1114
    %v1161 = vunpack.c.l.b16 %v1115
    %v1162 = vunpack.c.h.b16 %v1115
    %v1163 = vunpack.c.l.b16 %v1116
    %v1164 = vunpack.c.h.b16 %v1116
    %v1165 = vpack.c.b16 %v1135, %v1133
    %v1166 = vpack.c.b16 %v1136, %v1134
    %v1167 = vpack.c.b16 %v1139, %v1137
    %v1168 = vpack.c.b16 %v1140, %v1138
    %v1169 = vpack.c.b16 %v1143, %v1141
    %v1170 = vpack.c.b16 %v1144, %v1142
    %v1171 = vpack.c.b16 %v1147, %v1145
    %v1172 = vpack.c.b16 %v1148, %v1146
    %v1173 = vpack.c.b16 %v1151, %v1149
    %v1174 = vpack.c.b16 %v1152, %v1150
    %v1175 = vpack.c.b16 %v1155, %v1153
    %v1176 = vpack.c.b16 %v1156, %v1154
    %v1177 = vpack.c.b16 %v1159, %v1157
    %v1178 = vpack.c.b16 %v1160, %v1158
    %v1179 = vpack.c.b16 %v1163, %v1161
    %v1180 = vpack.c.b16 %v1164, %v1162
    %1197 = vmatprep.subr.bf16.mxu0 %v1166
    %1198 = vmatpush1.bf16.msra.mxu0 %v1165
    %1199 = vmatprep.subr.bf16.mxu0 %v1168
    %1200 = vmatpush1.bf16.msra.mxu0 %v1167
    %1201 = vmatprep.subr.bf16.mxu0 %v1170
    %1202 = vmatpush1.bf16.msra.mxu0 %v1169
    %1203 = vmatprep.subr.bf16.mxu0 %v1172
    %1204 = vmatpush1.bf16.msra.mxu0 %v1171
    %1205 = vmatprep.subr.bf16.mxu0 %v1174
    %1206 = vmatpush1.bf16.msra.mxu0 %v1173
    %1207 = vmatprep.subr.bf16.mxu0 %v1176
    %1208 = vmatpush1.bf16.msra.mxu0 %v1175
    %1209 = vmatprep.subr.bf16.mxu0 %v1178
    %1210 = vmatpush1.bf16.msra.mxu0 %v1177
    %1211 = vmatprep.subr.bf16.mxu0 %v1180
    %1212 = vmatpush1.bf16.msra.mxu0 %v1179
    %1213 = vmatprep.subr.bf16.mxu0 0
    %1214 = vmatpush1.bf16.msra.mxu0 0
    %1215 = vmatprep.subr.bf16.mxu0 0
    %1216 = vmatpush1.bf16.msra.mxu0 0
    %1217 = vmatprep.subr.bf16.mxu0 0
    %1218 = vmatpush1.bf16.msra.mxu0 0
    %1219 = vmatprep.subr.bf16.mxu0 0
    %1220 = vmatpush1.bf16.msra.mxu0 0
    %1221 = vmatprep.subr.bf16.mxu0 0
    %1222 = vmatpush1.bf16.msra.mxu0 0
    %1223 = vmatprep.subr.bf16.mxu0 0
    %1224 = vmatpush1.bf16.msra.mxu0 0
    %1225 = vmatprep.subr.bf16.mxu0 0
    %1226 = vmatpush1.bf16.msra.mxu0 0
    %1227 = vmatprep.subr.bf16.mxu0 0
    %1228 = vmatpush1.bf16.msra.mxu0 0
    %1229 = vmatprep.mubr.bf16.mxu0 0
    %1230 = vmatmul.mubr.bf16.gmra.mrb[0].mxu0 %v692
    %v1231 = vpop.f32.mrb[0].mxu0
    %v1232 = vadd.f32 0.0, %v1231
    %v1233 = vpop.f32.mrb[0].mxu0
    %v1234 = vadd.f32 0.0, %v1233
    %v1235 = vpop.f32.mrb[0].mxu0
    %v1236 = vadd.f32 0.0, %v1235
    %v1237 = vpop.f32.mrb[0].mxu0
    %v1238 = vadd.f32 0.0, %v1237
    %1239 = vmatprep.mubr.bf16.mxu0 0
    %1240 = vmatmul.mubr.bf16.gmra.mrb[0].mxu0 %v693
    %v1241 = vpop.f32.mrb[0].mxu0
    %v1242 = vadd.f32 0.0, %v1241
    %v1243 = vpop.f32.mrb[0].mxu0
    %v1244 = vadd.f32 0.0, %v1243
    %v1245 = vpop.f32.mrb[0].mxu0
    %v1246 = vadd.f32 0.0, %v1245
    %v1247 = vpop.f32.mrb[0].mxu0
    %v1248 = vadd.f32 0.0, %v1247
    %1249 = vmatprep.mubr.bf16.mxu0 0
    %1250 = vmatmul.mubr.bf16.gmra.mrb[0].mxu0 %v694
    %v1251 = vpop.f32.mrb[0].mxu0
    %v1252 = vadd.f32 0.0, %v1251
    %v1253 = vpop.f32.mrb[0].mxu0
    %v1254 = vadd.f32 0.0, %v1253
    %v1255 = vpop.f32.mrb[0].mxu0
    %v1256 = vadd.f32 0.0, %v1255
    %v1257 = vpop.f32.mrb[0].mxu0
    %v1258 = vadd.f32 0.0, %v1257
    %1259 = vmatprep.mubr.bf16.mxu0 0
    %1260 = vmatmul.mubr.bf16.gmra.mrb[0].mxu0 %v695
    %v1261 = vpop.f32.mrb[0].mxu0
    %v1262 = vadd.f32 0.0, %v1261
    %v1263 = vpop.f32.mrb[0].mxu0
    %v1264 = vadd.f32 0.0, %v1263
    %v1265 = vpop.f32.mrb[0].mxu0
    %v1266 = vadd.f32 0.0, %v1265
    %v1267 = vpop.f32.mrb[0].mxu0
    %v1268 = vadd.f32 0.0, %v1267
    %1269 = vmatprep.mubr.bf16.mxu0 0
    %1270 = vmatmul.mubr.bf16.gmra.mrb[0].mxu0 %v696
    %v1271 = vpop.f32.mrb[0].mxu0
    %v1272 = vadd.f32 0.0, %v1271
    %v1273 = vpop.f32.mrb[0].mxu0
    %v1274 = vadd.f32 0.0, %v1273
    %v1275 = vpop.f32.mrb[0].mxu0
    %v1276 = vadd.f32 0.0, %v1275
    %v1277 = vpop.f32.mrb[0].mxu0
    %v1278 = vadd.f32 0.0, %v1277
    %1279 = vmatprep.mubr.bf16.mxu0 0
    %1280 = vmatmul.mubr.bf16.gmra.mrb[0].mxu0 %v697
    %v1281 = vpop.f32.mrb[0].mxu0
    %v1282 = vadd.f32 0.0, %v1281
    %v1283 = vpop.f32.mrb[0].mxu0
    %v1284 = vadd.f32 0.0, %v1283
    %v1285 = vpop.f32.mrb[0].mxu0
    %v1286 = vadd.f32 0.0, %v1285
    %v1287 = vpop.f32.mrb[0].mxu0
    %v1288 = vadd.f32 0.0, %v1287
    %1289 = vmatprep.mubr.bf16.mxu0 0
    %1290 = vmatmul.mubr.bf16.gmra.mrb[0].mxu0 %v698
    %v1291 = vpop.f32.mrb[0].mxu0
    %v1292 = vadd.f32 0.0, %v1291
    %v1293 = vpop.f32.mrb[0].mxu0
    %v1294 = vadd.f32 0.0, %v1293
    %v1295 = vpop.f32.mrb[0].mxu0
    %v1296 = vadd.f32 0.0, %v1295
    %v1297 = vpop.f32.mrb[0].mxu0
    %v1298 = vadd.f32 0.0, %v1297
    %1299 = vmatprep.mubr.bf16.mxu0 0
    %1300 = vmatmul.mubr.bf16.gmra.mrb[0].mxu0 %v699
    %v1301 = vpop.f32.mrb[0].mxu0
    %v1302 = vadd.f32 0.0, %v1301
    %v1303 = vpop.f32.mrb[0].mxu0
    %v1304 = vadd.f32 0.0, %v1303
    %v1305 = vpop.f32.mrb[0].mxu0
    %v1306 = vadd.f32 0.0, %v1305
    %v1307 = vpop.f32.mrb[0].mxu0
    %v1308 = vadd.f32 0.0, %v1307
    %1309 = vmatprep.mubr.bf16.mxu0 0
    %1310 = vmatmul.mubr.bf16.gmra.mrb[0].mxu0 %v700
    %v1311 = vpop.f32.mrb[0].mxu0
    %v1312 = vadd.f32 0.0, %v1311
    %v1313 = vpop.f32.mrb[0].mxu0
    %v1314 = vadd.f32 0.0, %v1313
    %v1315 = vpop.f32.mrb[0].mxu0
    %v1316 = vadd.f32 0.0, %v1315
    %v1317 = vpop.f32.mrb[0].mxu0
    %v1318 = vadd.f32 0.0, %v1317
    %1319 = vmatprep.mubr.bf16.mxu0 0
    %1320 = vmatmul.mubr.bf16.gmra.mrb[0].mxu0 %v701
    %v1321 = vpop.f32.mrb[0].mxu0
    %v1322 = vadd.f32 0.0, %v1321
    %v1323 = vpop.f32.mrb[0].mxu0
    %v1324 = vadd.f32 0.0, %v1323
    %v1325 = vpop.f32.mrb[0].mxu0
    %v1326 = vadd.f32 0.0, %v1325
    %v1327 = vpop.f32.mrb[0].mxu0
    %v1328 = vadd.f32 0.0, %v1327
    %1329 = vmatprep.mubr.bf16.mxu0 0
    %1330 = vmatmul.mubr.bf16.gmra.mrb[0].mxu0 %v702
    %v1331 = vpop.f32.mrb[0].mxu0
    %v1332 = vadd.f32 0.0, %v1331
    %v1333 = vpop.f32.mrb[0].mxu0
    %v1334 = vadd.f32 0.0, %v1333
    %v1335 = vpop.f32.mrb[0].mxu0
    %v1336 = vadd.f32 0.0, %v1335
    %v1337 = vpop.f32.mrb[0].mxu0
    %v1338 = vadd.f32 0.0, %v1337
    %1339 = vmatprep.mubr.bf16.mxu0 0
    %1340 = vmatmul.mubr.bf16.gmra.mrb[0].mxu0 %v703
    %v1341 = vpop.f32.mrb[0].mxu0
    %v1342 = vadd.f32 0.0, %v1341
    %v1343 = vpop.f32.mrb[0].mxu0
    %v1344 = vadd.f32 0.0, %v1343
    %v1345 = vpop.f32.mrb[0].mxu0
    %v1346 = vadd.f32 0.0, %v1345
    %v1347 = vpop.f32.mrb[0].mxu0
    %v1348 = vadd.f32 0.0, %v1347
    %1349 = vmatprep.mubr.bf16.mxu0 0
    %1350 = vmatmul.mubr.bf16.gmra.mrb[0].mxu0 %v704
    %v1351 = vpop.f32.mrb[0].mxu0
    %v1352 = vadd.f32 0.0, %v1351
    %v1353 = vpop.f32.mrb[0].mxu0
    %v1354 = vadd.f32 0.0, %v1353
    %v1355 = vpop.f32.mrb[0].mxu0
    %v1356 = vadd.f32 0.0, %v1355
    %v1357 = vpop.f32.mrb[0].mxu0
    %v1358 = vadd.f32 0.0, %v1357
    %1359 = vmatprep.mubr.bf16.mxu0 0
    %1360 = vmatmul.mubr.bf16.gmra.mrb[0].mxu0 %v705
    %v1361 = vpop.f32.mrb[0].mxu0
    %v1362 = vadd.f32 0.0, %v1361
    %v1363 = vpop.f32.mrb[0].mxu0
    %v1364 = vadd.f32 0.0, %v1363
    %v1365 = vpop.f32.mrb[0].mxu0
    %v1366 = vadd.f32 0.0, %v1365
    %v1367 = vpop.f32.mrb[0].mxu0
    %v1368 = vadd.f32 0.0, %v1367
    %1369 = vmatprep.mubr.bf16.mxu0 0
    %1370 = vmatmul.mubr.bf16.gmra.mrb[0].mxu0 %v706
    %v1371 = vpop.f32.mrb[0].mxu0
    %v1372 = vadd.f32 0.0, %v1371
    %v1373 = vpop.f32.mrb[0].mxu0
    %v1374 = vadd.f32 0.0, %v1373
    %v1375 = vpop.f32.mrb[0].mxu0
    %v1376 = vadd.f32 0.0, %v1375
    %v1377 = vpop.f32.mrb[0].mxu0
    %v1378 = vadd.f32 0.0, %v1377
    %1379 = vmatprep.mubr.bf16.mxu0 0
    %1380 = vmatmul.mubr.bf16.gmra.mrb[0].mxu0 %v707
    %v1381 = vpop.f32.mrb[0].mxu0
    %v1382 = vadd.f32 0.0, %v1381
    %v1383 = vpop.f32.mrb[0].mxu0
    %v1384 = vadd.f32 0.0, %v1383
    %v1385 = vpop.f32.mrb[0].mxu0
    %v1386 = vadd.f32 0.0, %v1385
    %v1387 = vpop.f32.mrb[0].mxu0
    %v1388 = vadd.f32 0.0, %v1387
    %1389 = vdwg.mxu0
    %v1390 = vmax.f32 %v1232, %v1236
    %v1391 = vmax.f32 %v1390, %v1242
    %v1392 = vmax.f32 %v1391, %v1246
    %v1393 = vmax.f32 %v1392, %v1252
    %v1394 = vmax.f32 %v1393, %v1256
    %v1395 = vmax.f32 %v1394, %v1262
    %v1396 = vmax.f32 %v1395, %v1266
    %v1397 = vmax.f32 %v1396, %v1272
    %v1398 = vmax.f32 %v1397, %v1276
    %v1399 = vmax.f32 %v1398, %v1282
    %v1400 = vmax.f32 %v1399, %v1286
    %v1401 = vmax.f32 %v1400, %v1292
    %v1402 = vmax.f32 %v1401, %v1296
    %v1403 = vmax.f32 %v1402, %v1302
    %v1404 = vmax.f32 %v1403, %v1306
    %v1405 = vrot.slane %v1404, 4
    %v1406 = vmax.f32 %v1404, %v1405
    %v1407 = vrot.slane %v1406, 2
    %v1408 = vmax.f32 %v1406, %v1407
    %v1409 = vrot.slane %v1408, 1
    %v1410 = vmax.f32 %v1408, %v1409
    %v1411 = vmax.f32 %v1234, %v1238
    %v1412 = vmax.f32 %v1411, %v1244
    %v1413 = vmax.f32 %v1412, %v1248
    %v1414 = vmax.f32 %v1413, %v1254
    %v1415 = vmax.f32 %v1414, %v1258
    %v1416 = vmax.f32 %v1415, %v1264
    %v1417 = vmax.f32 %v1416, %v1268
    %v1418 = vmax.f32 %v1417, %v1274
    %v1419 = vmax.f32 %v1418, %v1278
    %v1420 = vmax.f32 %v1419, %v1284
    %v1421 = vmax.f32 %v1420, %v1288
    %v1422 = vmax.f32 %v1421, %v1294
    %v1423 = vmax.f32 %v1422, %v1298
    %v1424 = vmax.f32 %v1423, %v1304
    %v1425 = vmax.f32 %v1424, %v1308
    %v1426 = vrot.slane %v1425, 4
    %v1427 = vmax.f32 %v1425, %v1426
    %v1428 = vrot.slane %v1427, 2
    %v1429 = vmax.f32 %v1427, %v1428
    %v1430 = vrot.slane %v1429, 1
    %v1431 = vmax.f32 %v1429, %v1430
    %v1432 = vmax.f32 %v1312, %v1316
    %v1433 = vmax.f32 %v1432, %v1322
    %v1434 = vmax.f32 %v1433, %v1326
    %v1435 = vmax.f32 %v1434, %v1332
    %v1436 = vmax.f32 %v1435, %v1336
    %v1437 = vmax.f32 %v1436, %v1342
    %v1438 = vmax.f32 %v1437, %v1346
    %v1439 = vmax.f32 %v1438, %v1352
    %v1440 = vmax.f32 %v1439, %v1356
    %v1441 = vmax.f32 %v1440, %v1362
    %v1442 = vmax.f32 %v1441, %v1366
    %v1443 = vmax.f32 %v1442, %v1372
    %v1444 = vmax.f32 %v1443, %v1376
    %v1445 = vmax.f32 %v1444, %v1382
    %v1446 = vmax.f32 %v1445, %v1386
    %v1447 = vrot.slane %v1446, 4
    %v1448 = vmax.f32 %v1446, %v1447
    %v1449 = vrot.slane %v1448, 2
    %v1450 = vmax.f32 %v1448, %v1449
    %v1451 = vrot.slane %v1450, 1
    %v1452 = vmax.f32 %v1450, %v1451
    %v1453 = vmax.f32 %v1314, %v1318
    %v1454 = vmax.f32 %v1453, %v1324
    %v1455 = vmax.f32 %v1454, %v1328
    %v1456 = vmax.f32 %v1455, %v1334
    %v1457 = vmax.f32 %v1456, %v1338
    %v1458 = vmax.f32 %v1457, %v1344
    %v1459 = vmax.f32 %v1458, %v1348
    %v1460 = vmax.f32 %v1459, %v1354
    %v1461 = vmax.f32 %v1460, %v1358
    %v1462 = vmax.f32 %v1461, %v1364
    %v1463 = vmax.f32 %v1462, %v1368
    %v1464 = vmax.f32 %v1463, %v1374
    %v1465 = vmax.f32 %v1464, %v1378
    %v1466 = vmax.f32 %v1465, %v1384
    %v1467 = vmax.f32 %v1466, %v1388
    %v1468 = vrot.slane %v1467, 4
    %v1469 = vmax.f32 %v1467, %v1468
    %v1470 = vrot.slane %v1469, 2
    %v1471 = vmax.f32 %v1469, %v1470
    %v1472 = vrot.slane %v1471, 1
    %v1473 = vmax.f32 %v1471, %v1472
    %v1474 = vld [vmem:[%s6 + $0x2] sm:$0x3]
    %v1476 = vlaneseq
    %v1477 = vshrl.u32 %v1476, 7
    %v1478 = vsub.s32 0, %v1477
    %v1479 = vrot.slane %v1474, %v1478
    %v1480 = vlaneseq
    %v1481 = vshrl.u32 %v1480, 7
    %v1482 = vsub.s32 1, %v1481
    %v1483 = vrot.slane %v1474, %v1482
    %v1486 = vadd.f32 %v1410, %v1479
    %v1487 = vadd.f32 %v1431, %v1483
    %v1488 = vadd.f32 %v1452, %v1479
    %v1489 = vadd.f32 %v1473, %v1483
    %v1490 = vmax.f32 %v1486, 0.0
    %v1491 = vmax.f32 %v1487, 0.0
    %v1492 = vmax.f32 %v1488, 0.0
    %v1493 = vmax.f32 %v1489, 0.0
    %v1494 = vld [vmem:[#allocation5 + $0x10] sm:$0xff]
    %v1495 = vld [vmem:[#allocation5 + $0x30] sm:$0xff]
    %v1496 = vld [vmem:[#allocation5 + $0x50] sm:$0xff]
    %v1497 = vld [vmem:[#allocation5 + $0x70] sm:$0xff]
    %v1498 = vld [vmem:[#allocation5 + $0x90] sm:$0xff]
    %v1499 = vld [vmem:[#allocation5 + $0xb0] sm:$0xff]
    %v1500 = vld [vmem:[#allocation5 + $0xd0] sm:$0xff]
    %v1501 = vld [vmem:[#allocation5 + $0xf0] sm:$0xff]
    %v1502 = vld [vmem:[#allocation5 + $0x110] sm:$0xff]
    %v1503 = vld [vmem:[#allocation5 + $0x130] sm:$0xff]
    %v1504 = vld [vmem:[#allocation5 + $0x150] sm:$0xff]
    %v1505 = vld [vmem:[#allocation5 + $0x170] sm:$0xff]
    %v1506 = vld [vmem:[#allocation5 + $0x190] sm:$0xff]
    %v1507 = vld [vmem:[#allocation5 + $0x1b0] sm:$0xff]
    %v1508 = vld [vmem:[#allocation5 + $0x1d0] sm:$0xff]
    %v1509 = vld [vmem:[#allocation5 + $0x1f0] sm:$0xff]
    %v1526 = vunpack.c.l.b16 %v1494
    %v1527 = vunpack.c.h.b16 %v1494
    %v1528 = vunpack.c.l.b16 %v1495
    %v1529 = vunpack.c.h.b16 %v1495
    %v1530 = vunpack.c.l.b16 %v1496
    %v1531 = vunpack.c.h.b16 %v1496
    %v1532 = vunpack.c.l.b16 %v1497
    %v1533 = vunpack.c.h.b16 %v1497
    %v1534 = vunpack.c.l.b16 %v1498
    %v1535 = vunpack.c.h.b16 %v1498
    %v1536 = vunpack.c.l.b16 %v1499
    %v1537 = vunpack.c.h.b16 %v1499
    %v1538 = vunpack.c.l.b16 %v1500
    %v1539 = vunpack.c.h.b16 %v1500
    %v1540 = vunpack.c.l.b16 %v1501
    %v1541 = vunpack.c.h.b16 %v1501
    %v1542 = vunpack.c.l.b16 %v1502
    %v1543 = vunpack.c.h.b16 %v1502
    %v1544 = vunpack.c.l.b16 %v1503
    %v1545 = vunpack.c.h.b16 %v1503
    %v1546 = vunpack.c.l.b16 %v1504
    %v1547 = vunpack.c.h.b16 %v1504
    %v1548 = vunpack.c.l.b16 %v1505
    %v1549 = vunpack.c.h.b16 %v1505
    %v1550 = vunpack.c.l.b16 %v1506
    %v1551 = vunpack.c.h.b16 %v1506
    %v1552 = vunpack.c.l.b16 %v1507
    %v1553 = vunpack.c.h.b16 %v1507
    %v1554 = vunpack.c.l.b16 %v1508
    %v1555 = vunpack.c.h.b16 %v1508
    %v1556 = vunpack.c.l.b16 %v1509
    %v1557 = vunpack.c.h.b16 %v1509
    %v1558 = vpack.c.b16 %v1528, %v1526
    %v1559 = vpack.c.b16 %v1529, %v1527
    %v1560 = vpack.c.b16 %v1532, %v1530
    %v1561 = vpack.c.b16 %v1533, %v1531
    %v1562 = vpack.c.b16 %v1536, %v1534
    %v1563 = vpack.c.b16 %v1537, %v1535
    %v1564 = vpack.c.b16 %v1540, %v1538
    %v1565 = vpack.c.b16 %v1541, %v1539
    %v1566 = vpack.c.b16 %v1544, %v1542
    %v1567 = vpack.c.b16 %v1545, %v1543
    %v1568 = vpack.c.b16 %v1548, %v1546
    %v1569 = vpack.c.b16 %v1549, %v1547
    %v1570 = vpack.c.b16 %v1552, %v1550
    %v1571 = vpack.c.b16 %v1553, %v1551
    %v1572 = vpack.c.b16 %v1556, %v1554
    %v1573 = vpack.c.b16 %v1557, %v1555
    %1590 = vmatprep.subr.bf16.mxu0 %v1559
    %1591 = vmatpush1.bf16.msra.mxu0 %v1558
    %1592 = vmatprep.subr.bf16.mxu0 %v1561
    %1593 = vmatpush1.bf16.msra.mxu0 %v1560
    %1594 = vmatprep.subr.bf16.mxu0 %v1563
    %1595 = vmatpush1.bf16.msra.mxu0 %v1562
    %1596 = vmatprep.subr.bf16.mxu0 %v1565
    %1597 = vmatpush1.bf16.msra.mxu0 %v1564
    %1598 = vmatprep.subr.bf16.mxu0 %v1567
    %1599 = vmatpush1.bf16.msra.mxu0 %v1566
    %1600 = vmatprep.subr.bf16.mxu0 %v1569
    %1601 = vmatpush1.bf16.msra.mxu0 %v1568
    %1602 = vmatprep.subr.bf16.mxu0 %v1571
    %1603 = vmatpush1.bf16.msra.mxu0 %v1570
    %1604 = vmatprep.subr.bf16.mxu0 %v1573
    %1605 = vmatpush1.bf16.msra.mxu0 %v1572
    %1606 = vmatprep.subr.bf16.mxu0 0
    %1607 = vmatpush1.bf16.msra.mxu0 0
    %1608 = vmatprep.subr.bf16.mxu0 0
    %1609 = vmatpush1.bf16.msra.mxu0 0
    %1610 = vmatprep.subr.bf16.mxu0 0
    %1611 = vmatpush1.bf16.msra.mxu0 0
    %1612 = vmatprep.subr.bf16.mxu0 0
    %1613 = vmatpush1.bf16.msra.mxu0 0
    %1614 = vmatprep.subr.bf16.mxu0 0
    %1615 = vmatpush1.bf16.msra.mxu0 0
    %1616 = vmatprep.subr.bf16.mxu0 0
    %1617 = vmatpush1.bf16.msra.mxu0 0
    %1618 = vmatprep.subr.bf16.mxu0 0
    %1619 = vmatpush1.bf16.msra.mxu0 0
    %1620 = vmatprep.subr.bf16.mxu0 0
    %1621 = vmatpush1.bf16.msra.mxu0 0
    %1622 = vmatprep.mubr.bf16.mxu0 0
    %1623 = vmatmul.mubr.bf16.gmra.mrb[0].mxu0 %v692
    %v1624 = vpop.f32.mrb[0].mxu0
    %v1625 = vadd.f32 0.0, %v1624
    %v1626 = vpop.f32.mrb[0].mxu0
    %v1627 = vadd.f32 0.0, %v1626
    %v1628 = vpop.f32.mrb[0].mxu0
    %v1629 = vadd.f32 0.0, %v1628
    %v1630 = vpop.f32.mrb[0].mxu0
    %v1631 = vadd.f32 0.0, %v1630
    %1632 = vmatprep.mubr.bf16.mxu0 0
    %1633 = vmatmul.mubr.bf16.gmra.mrb[0].mxu0 %v693
    %v1634 = vpop.f32.mrb[0].mxu0
    %v1635 = vadd.f32 0.0, %v1634
    %v1636 = vpop.f32.mrb[0].mxu0
    %v1637 = vadd.f32 0.0, %v1636
    %v1638 = vpop.f32.mrb[0].mxu0
    %v1639 = vadd.f32 0.0, %v1638
    %v1640 = vpop.f32.mrb[0].mxu0
    %v1641 = vadd.f32 0.0, %v1640
    %1642 = vmatprep.mubr.bf16.mxu0 0
    %1643 = vmatmul.mubr.bf16.gmra.mrb[0].mxu0 %v694
    %v1644 = vpop.f32.mrb[0].mxu0
    %v1645 = vadd.f32 0.0, %v1644
    %v1646 = vpop.f32.mrb[0].mxu0
    %v1647 = vadd.f32 0.0, %v1646
    %v1648 = vpop.f32.mrb[0].mxu0
    %v1649 = vadd.f32 0.0, %v1648
    %v1650 = vpop.f32.mrb[0].mxu0
    %v1651 = vadd.f32 0.0, %v1650
    %1652 = vmatprep.mubr.bf16.mxu0 0
    %1653 = vmatmul.mubr.bf16.gmra.mrb[0].mxu0 %v695
    %v1654 = vpop.f32.mrb[0].mxu0
    %v1655 = vadd.f32 0.0, %v1654
    %v1656 = vpop.f32.mrb[0].mxu0
    %v1657 = vadd.f32 0.0, %v1656
    %v1658 = vpop.f32.mrb[0].mxu0
    %v1659 = vadd.f32 0.0, %v1658
    %v1660 = vpop.f32.mrb[0].mxu0
    %v1661 = vadd.f32 0.0, %v1660
    %1662 = vmatprep.mubr.bf16.mxu0 0
    %1663 = vmatmul.mubr.bf16.gmra.mrb[0].mxu0 %v696
    %v1664 = vpop.f32.mrb[0].mxu0
    %v1665 = vadd.f32 0.0, %v1664
    %v1666 = vpop.f32.mrb[0].mxu0
    %v1667 = vadd.f32 0.0, %v1666
    %v1668 = vpop.f32.mrb[0].mxu0
    %v1669 = vadd.f32 0.0, %v1668
    %v1670 = vpop.f32.mrb[0].mxu0
    %v1671 = vadd.f32 0.0, %v1670
    %1672 = vmatprep.mubr.bf16.mxu0 0
    %1673 = vmatmul.mubr.bf16.gmra.mrb[0].mxu0 %v697
    %v1674 = vpop.f32.mrb[0].mxu0
    %v1675 = vadd.f32 0.0, %v1674
    %v1676 = vpop.f32.mrb[0].mxu0
    %v1677 = vadd.f32 0.0, %v1676
    %v1678 = vpop.f32.mrb[0].mxu0
    %v1679 = vadd.f32 0.0, %v1678
    %v1680 = vpop.f32.mrb[0].mxu0
    %v1681 = vadd.f32 0.0, %v1680
    %1682 = vmatprep.mubr.bf16.mxu0 0
    %1683 = vmatmul.mubr.bf16.gmra.mrb[0].mxu0 %v698
    %v1684 = vpop.f32.mrb[0].mxu0
    %v1685 = vadd.f32 0.0, %v1684
    %v1686 = vpop.f32.mrb[0].mxu0
    %v1687 = vadd.f32 0.0, %v1686
    %v1688 = vpop.f32.mrb[0].mxu0
    %v1689 = vadd.f32 0.0, %v1688
    %v1690 = vpop.f32.mrb[0].mxu0
    %v1691 = vadd.f32 0.0, %v1690
    %1692 = vmatprep.mubr.bf16.mxu0 0
    %1693 = vmatmul.mubr.bf16.gmra.mrb[0].mxu0 %v699
    %v1694 = vpop.f32.mrb[0].mxu0
    %v1695 = vadd.f32 0.0, %v1694
    %v1696 = vpop.f32.mrb[0].mxu0
    %v1697 = vadd.f32 0.0, %v1696
    %v1698 = vpop.f32.mrb[0].mxu0
    %v1699 = vadd.f32 0.0, %v1698
    %v1700 = vpop.f32.mrb[0].mxu0
    %v1701 = vadd.f32 0.0, %v1700
    %1702 = vmatprep.mubr.bf16.mxu0 0
    %1703 = vmatmul.mubr.bf16.gmra.mrb[0].mxu0 %v700
    %v1704 = vpop.f32.mrb[0].mxu0
    %v1705 = vadd.f32 0.0, %v1704
    %v1706 = vpop.f32.mrb[0].mxu0
    %v1707 = vadd.f32 0.0, %v1706
    %v1708 = vpop.f32.mrb[0].mxu0
    %v1709 = vadd.f32 0.0, %v1708
    %v1710 = vpop.f32.mrb[0].mxu0
    %v1711 = vadd.f32 0.0, %v1710
    %1712 = vmatprep.mubr.bf16.mxu0 0
    %1713 = vmatmul.mubr.bf16.gmra.mrb[0].mxu0 %v701
    %v1714 = vpop.f32.mrb[0].mxu0
    %v1715 = vadd.f32 0.0, %v1714
    %v1716 = vpop.f32.mrb[0].mxu0
    %v1717 = vadd.f32 0.0, %v1716
    %v1718 = vpop.f32.mrb[0].mxu0
    %v1719 = vadd.f32 0.0, %v1718
    %v1720 = vpop.f32.mrb[0].mxu0
    %v1721 = vadd.f32 0.0, %v1720
    %1722 = vmatprep.mubr.bf16.mxu0 0
    %1723 = vmatmul.mubr.bf16.gmra.mrb[0].mxu0 %v702
    %v1724 = vpop.f32.mrb[0].mxu0
    %v1725 = vadd.f32 0.0, %v1724
    %v1726 = vpop.f32.mrb[0].mxu0
    %v1727 = vadd.f32 0.0, %v1726
    %v1728 = vpop.f32.mrb[0].mxu0
    %v1729 = vadd.f32 0.0, %v1728
    %v1730 = vpop.f32.mrb[0].mxu0
    %v1731 = vadd.f32 0.0, %v1730
    %1732 = vmatprep.mubr.bf16.mxu0 0
    %1733 = vmatmul.mubr.bf16.gmra.mrb[0].mxu0 %v703
    %v1734 = vpop.f32.mrb[0].mxu0
    %v1735 = vadd.f32 0.0, %v1734
    %v1736 = vpop.f32.mrb[0].mxu0
    %v1737 = vadd.f32 0.0, %v1736
    %v1738 = vpop.f32.mrb[0].mxu0
    %v1739 = vadd.f32 0.0, %v1738
    %v1740 = vpop.f32.mrb[0].mxu0
    %v1741 = vadd.f32 0.0, %v1740
    %1742 = vmatprep.mubr.bf16.mxu0 0
    %1743 = vmatmul.mubr.bf16.gmra.mrb[0].mxu0 %v704
    %v1744 = vpop.f32.mrb[0].mxu0
    %v1745 = vadd.f32 0.0, %v1744
    %v1746 = vpop.f32.mrb[0].mxu0
    %v1747 = vadd.f32 0.0, %v1746
    %v1748 = vpop.f32.mrb[0].mxu0
    %v1749 = vadd.f32 0.0, %v1748
    %v1750 = vpop.f32.mrb[0].mxu0
    %v1751 = vadd.f32 0.0, %v1750
    %1752 = vmatprep.mubr.bf16.mxu0 0
    %1753 = vmatmul.mubr.bf16.gmra.mrb[0].mxu0 %v705
    %v1754 = vpop.f32.mrb[0].mxu0
    %v1755 = vadd.f32 0.0, %v1754
    %v1756 = vpop.f32.mrb[0].mxu0
    %v1757 = vadd.f32 0.0, %v1756
    %v1758 = vpop.f32.mrb[0].mxu0
    %v1759 = vadd.f32 0.0, %v1758
    %v1760 = vpop.f32.mrb[0].mxu0
    %v1761 = vadd.f32 0.0, %v1760
    %1762 = vmatprep.mubr.bf16.mxu0 0
    %1763 = vmatmul.mubr.bf16.gmra.mrb[0].mxu0 %v706
    %v1764 = vpop.f32.mrb[0].mxu0
    %v1765 = vadd.f32 0.0, %v1764
    %v1766 = vpop.f32.mrb[0].mxu0
    %v1767 = vadd.f32 0.0, %v1766
    %v1768 = vpop.f32.mrb[0].mxu0
    %v1769 = vadd.f32 0.0, %v1768
    %v1770 = vpop.f32.mrb[0].mxu0
    %v1771 = vadd.f32 0.0, %v1770
    %1772 = vmatprep.mubr.bf16.mxu0 0
    %1773 = vmatmul.mubr.bf16.gmra.mrb[0].mxu0 %v707
    %v1774 = vpop.f32.mrb[0].mxu0
    %v1775 = vadd.f32 0.0, %v1774
    %v1776 = vpop.f32.mrb[0].mxu0
    %v1777 = vadd.f32 0.0, %v1776
    %v1778 = vpop.f32.mrb[0].mxu0
    %v1779 = vadd.f32 0.0, %v1778
    %v1780 = vpop.f32.mrb[0].mxu0
    %v1781 = vadd.f32 0.0, %v1780
    %1782 = vdwg.mxu0
    %v1783 = vmax.f32 %v1625, %v1629
    %v1784 = vmax.f32 %v1783, %v1635
    %v1785 = vmax.f32 %v1784, %v1639
    %v1786 = vmax.f32 %v1785, %v1645
    %v1787 = vmax.f32 %v1786, %v1649
    %v1788 = vmax.f32 %v1787, %v1655
    %v1789 = vmax.f32 %v1788, %v1659
    %v1790 = vmax.f32 %v1789, %v1665
    %v1791 = vmax.f32 %v1790, %v1669
    %v1792 = vmax.f32 %v1791, %v1675
    %v1793 = vmax.f32 %v1792, %v1679
    %v1794 = vmax.f32 %v1793, %v1685
    %v1795 = vmax.f32 %v1794, %v1689
    %v1796 = vmax.f32 %v1795, %v1695
    %v1797 = vmax.f32 %v1796, %v1699
    %v1798 = vrot.slane %v1797, 4
    %v1799 = vmax.f32 %v1797, %v1798
    %v1800 = vrot.slane %v1799, 2
    %v1801 = vmax.f32 %v1799, %v1800
    %v1802 = vrot.slane %v1801, 1
    %v1803 = vmax.f32 %v1801, %v1802
    %v1804 = vmax.f32 %v1627, %v1631
    %v1805 = vmax.f32 %v1804, %v1637
    %v1806 = vmax.f32 %v1805, %v1641
    %v1807 = vmax.f32 %v1806, %v1647
    %v1808 = vmax.f32 %v1807, %v1651
    %v1809 = vmax.f32 %v1808, %v1657
    %v1810 = vmax.f32 %v1809, %v1661
    %v1811 = vmax.f32 %v1810, %v1667
    %v1812 = vmax.f32 %v1811, %v1671
    %v1813 = vmax.f32 %v1812, %v1677
    %v1814 = vmax.f32 %v1813, %v1681
    %v1815 = vmax.f32 %v1814, %v1687
    %v1816 = vmax.f32 %v1815, %v1691
    %v1817 = vmax.f32 %v1816, %v1697
    %v1818 = vmax.f32 %v1817, %v1701
    %v1819 = vrot.slane %v1818, 4
    %v1820 = vmax.f32 %v1818, %v1819
    %v1821 = vrot.slane %v1820, 2
    %v1822 = vmax.f32 %v1820, %v1821
    %v1823 = vrot.slane %v1822, 1
    %v1824 = vmax.f32 %v1822, %v1823
    %v1825 = vmax.f32 %v1705, %v1709
    %v1826 = vmax.f32 %v1825, %v1715
    %v1827 = vmax.f32 %v1826, %v1719
    %v1828 = vmax.f32 %v1827, %v1725
    %v1829 = vmax.f32 %v1828, %v1729
    %v1830 = vmax.f32 %v1829, %v1735
    %v1831 = vmax.f32 %v1830, %v1739
    %v1832 = vmax.f32 %v1831, %v1745
    %v1833 = vmax.f32 %v1832, %v1749
    %v1834 = vmax.f32 %v1833, %v1755
    %v1835 = vmax.f32 %v1834, %v1759
    %v1836 = vmax.f32 %v1835, %v1765
    %v1837 = vmax.f32 %v1836, %v1769
    %v1838 = vmax.f32 %v1837, %v1775
    %v1839 = vmax.f32 %v1838, %v1779
    %v1840 = vrot.slane %v1839, 4
    %v1841 = vmax.f32 %v1839, %v1840
    %v1842 = vrot.slane %v1841, 2
    %v1843 = vmax.f32 %v1841, %v1842
    %v1844 = vrot.slane %v1843, 1
    %v1845 = vmax.f32 %v1843, %v1844
    %v1846 = vmax.f32 %v1707, %v1711
    %v1847 = vmax.f32 %v1846, %v1717
    %v1848 = vmax.f32 %v1847, %v1721
    %v1849 = vmax.f32 %v1848, %v1727
    %v1850 = vmax.f32 %v1849, %v1731
    %v1851 = vmax.f32 %v1850, %v1737
    %v1852 = vmax.f32 %v1851, %v1741
    %v1853 = vmax.f32 %v1852, %v1747
    %v1854 = vmax.f32 %v1853, %v1751
    %v1855 = vmax.f32 %v1854, %v1757
    %v1856 = vmax.f32 %v1855, %v1761
    %v1857 = vmax.f32 %v1856, %v1767
    %v1858 = vmax.f32 %v1857, %v1771
    %v1859 = vmax.f32 %v1858, %v1777
    %v1860 = vmax.f32 %v1859, %v1781
    %v1861 = vrot.slane %v1860, 4
    %v1862 = vmax.f32 %v1860, %v1861
    %v1863 = vrot.slane %v1862, 2
    %v1864 = vmax.f32 %v1862, %v1863
    %v1865 = vrot.slane %v1864, 1
    %v1866 = vmax.f32 %v1864, %v1865
    %v1867 = vld [vmem:[%s6 + $0x4] sm:$0x3]
    %v1869 = vlaneseq
    %v1870 = vshrl.u32 %v1869, 7
    %v1871 = vsub.s32 0, %v1870
    %v1872 = vrot.slane %v1867, %v1871
    %v1873 = vlaneseq
    %v1874 = vshrl.u32 %v1873, 7
    %v1875 = vsub.s32 1, %v1874
    %v1876 = vrot.slane %v1867, %v1875
    %v1879 = vadd.f32 %v1803, %v1872
    %v1880 = vadd.f32 %v1824, %v1876
    %v1881 = vadd.f32 %v1845, %v1872
    %v1882 = vadd.f32 %v1866, %v1876
    %v1883 = vmax.f32 %v1879, 0.0
    %v1884 = vmax.f32 %v1880, 0.0
    %v1885 = vmax.f32 %v1881, 0.0
    %v1886 = vmax.f32 %v1882, 0.0
    %v1887 = vld [vmem:[#allocation5 + $0x18] sm:$0xff]
    %v1888 = vld [vmem:[#allocation5 + $0x38] sm:$0xff]
    %v1889 = vld [vmem:[#allocation5 + $0x58] sm:$0xff]
    %v1890 = vld [vmem:[#allocation5 + $0x78] sm:$0xff]
    %v1891 = vld [vmem:[#allocation5 + $0x98] sm:$0xff]
    %v1892 = vld [vmem:[#allocation5 + $0xb8] sm:$0xff]
    %v1893 = vld [vmem:[#allocation5 + $0xd8] sm:$0xff]
    %v1894 = vld [vmem:[#allocation5 + $0xf8] sm:$0xff]
    %v1895 = vld [vmem:[#allocation5 + $0x118] sm:$0xff]
    %v1896 = vld [vmem:[#allocation5 + $0x138] sm:$0xff]
    %v1897 = vld [vmem:[#allocation5 + $0x158] sm:$0xff]
    %v1898 = vld [vmem:[#allocation5 + $0x178] sm:$0xff]
    %v1899 = vld [vmem:[#allocation5 + $0x198] sm:$0xff]
    %v1900 = vld [vmem:[#allocation5 + $0x1b8] sm:$0xff]
    %v1901 = vld [vmem:[#allocation5 + $0x1d8] sm:$0xff]
    %v1902 = vld [vmem:[#allocation5 + $0x1f8] sm:$0xff]
    %v1919 = vunpack.c.l.b16 %v1887
    %v1920 = vunpack.c.h.b16 %v1887
    %v1921 = vunpack.c.l.b16 %v1888
    %v1922 = vunpack.c.h.b16 %v1888
    %v1923 = vunpack.c.l.b16 %v1889
    %v1924 = vunpack.c.h.b16 %v1889
    %v1925 = vunpack.c.l.b16 %v1890
    %v1926 = vunpack.c.h.b16 %v1890
    %v1927 = vunpack.c.l.b16 %v1891
    %v1928 = vunpack.c.h.b16 %v1891
    %v1929 = vunpack.c.l.b16 %v1892
    %v1930 = vunpack.c.h.b16 %v1892
    %v1931 = vunpack.c.l.b16 %v1893
    %v1932 = vunpack.c.h.b16 %v1893
    %v1933 = vunpack.c.l.b16 %v1894
    %v1934 = vunpack.c.h.b16 %v1894
    %v1935 = vunpack.c.l.b16 %v1895
    %v1936 = vunpack.c.h.b16 %v1895
    %v1937 = vunpack.c.l.b16 %v1896
    %v1938 = vunpack.c.h.b16 %v1896
    %v1939 = vunpack.c.l.b16 %v1897
    %v1940 = vunpack.c.h.b16 %v1897
    %v1941 = vunpack.c.l.b16 %v1898
    %v1942 = vunpack.c.h.b16 %v1898
    %v1943 = vunpack.c.l.b16 %v1899
    %v1944 = vunpack.c.h.b16 %v1899
    %v1945 = vunpack.c.l.b16 %v1900
    %v1946 = vunpack.c.h.b16 %v1900
    %v1947 = vunpack.c.l.b16 %v1901
    %v1948 = vunpack.c.h.b16 %v1901
    %v1949 = vunpack.c.l.b16 %v1902
    %v1950 = vunpack.c.h.b16 %v1902
    %v1951 = vpack.c.b16 %v1921, %v1919
    %v1952 = vpack.c.b16 %v1922, %v1920
    %v1953 = vpack.c.b16 %v1925, %v1923
    %v1954 = vpack.c.b16 %v1926, %v1924
    %v1955 = vpack.c.b16 %v1929, %v1927
    %v1956 = vpack.c.b16 %v1930, %v1928
    %v1957 = vpack.c.b16 %v1933, %v1931
    %v1958 = vpack.c.b16 %v1934, %v1932
    %v1959 = vpack.c.b16 %v1937, %v1935
    %v1960 = vpack.c.b16 %v1938, %v1936
    %v1961 = vpack.c.b16 %v1941, %v1939
    %v1962 = vpack.c.b16 %v1942, %v1940
    %v1963 = vpack.c.b16 %v1945, %v1943
    %v1964 = vpack.c.b16 %v1946, %v1944
    %v1965 = vpack.c.b16 %v1949, %v1947
    %v1966 = vpack.c.b16 %v1950, %v1948
    %1983 = vmatprep.subr.bf16.mxu0 %v1952
    %1984 = vmatpush1.bf16.msra.mxu0 %v1951
    %1985 = vmatprep.subr.bf16.mxu0 %v1954
    %1986 = vmatpush1.bf16.msra.mxu0 %v1953
    %1987 = vmatprep.subr.bf16.mxu0 %v1956
    %1988 = vmatpush1.bf16.msra.mxu0 %v1955
    %1989 = vmatprep.subr.bf16.mxu0 %v1958
    %1990 = vmatpush1.bf16.msra.mxu0 %v1957
    %1991 = vmatprep.subr.bf16.mxu0 %v1960
    %1992 = vmatpush1.bf16.msra.mxu0 %v1959
    %1993 = vmatprep.subr.bf16.mxu0 %v1962
    %1994 = vmatpush1.bf16.msra.mxu0 %v1961
    %1995 = vmatprep.subr.bf16.mxu0 %v1964
    %1996 = vmatpush1.bf16.msra.mxu0 %v1963
    %1997 = vmatprep.subr.bf16.mxu0 %v1966
    %1998 = vmatpush1.bf16.msra.mxu0 %v1965
    %1999 = vmatprep.subr.bf16.mxu0 0
    %2000 = vmatpush1.bf16.msra.mxu0 0
    %2001 = vmatprep.subr.bf16.mxu0 0
    %2002 = vmatpush1.bf16.msra.mxu0 0
    %2003 = vmatprep.subr.bf16.mxu0 0
    %2004 = vmatpush1.bf16.msra.mxu0 0
    %2005 = vmatprep.subr.bf16.mxu0 0
    %2006 = vmatpush1.bf16.msra.mxu0 0
    %2007 = vmatprep.subr.bf16.mxu0 0
    %2008 = vmatpush1.bf16.msra.mxu0 0
    %2009 = vmatprep.subr.bf16.mxu0 0
    %2010 = vmatpush1.bf16.msra.mxu0 0
    %2011 = vmatprep.subr.bf16.mxu0 0
    %2012 = vmatpush1.bf16.msra.mxu0 0
    %2013 = vmatprep.subr.bf16.mxu0 0
    %2014 = vmatpush1.bf16.msra.mxu0 0
    %2015 = vmatprep.mubr.bf16.mxu0 0
    %2016 = vmatmul.mubr.bf16.gmra.mrb[0].mxu0 %v692
    %v2017 = vpop.f32.mrb[0].mxu0
    %v2018 = vadd.f32 0.0, %v2017
    %v2019 = vpop.f32.mrb[0].mxu0
    %v2020 = vadd.f32 0.0, %v2019
    %v2021 = vpop.f32.mrb[0].mxu0
    %v2022 = vadd.f32 0.0, %v2021
    %v2023 = vpop.f32.mrb[0].mxu0
    %v2024 = vadd.f32 0.0, %v2023
    %2025 = vmatprep.mubr.bf16.mxu0 0
    %2026 = vmatmul.mubr.bf16.gmra.mrb[0].mxu0 %v693
    %v2027 = vpop.f32.mrb[0].mxu0
    %v2028 = vadd.f32 0.0, %v2027
    %v2029 = vpop.f32.mrb[0].mxu0
    %v2030 = vadd.f32 0.0, %v2029
    %v2031 = vpop.f32.mrb[0].mxu0
    %v2032 = vadd.f32 0.0, %v2031
    %v2033 = vpop.f32.mrb[0].mxu0
    %v2034 = vadd.f32 0.0, %v2033
    %2035 = vmatprep.mubr.bf16.mxu0 0
    %2036 = vmatmul.mubr.bf16.gmra.mrb[0].mxu0 %v694
    %v2037 = vpop.f32.mrb[0].mxu0
    %v2038 = vadd.f32 0.0, %v2037
    %v2039 = vpop.f32.mrb[0].mxu0
    %v2040 = vadd.f32 0.0, %v2039
    %v2041 = vpop.f32.mrb[0].mxu0
    %v2042 = vadd.f32 0.0, %v2041
    %v2043 = vpop.f32.mrb[0].mxu0
    %v2044 = vadd.f32 0.0, %v2043
    %2045 = vmatprep.mubr.bf16.mxu0 0
    %2046 = vmatmul.mubr.bf16.gmra.mrb[0].mxu0 %v695
    %v2047 = vpop.f32.mrb[0].mxu0
    %v2048 = vadd.f32 0.0, %v2047
    %v2049 = vpop.f32.mrb[0].mxu0
    %v2050 = vadd.f32 0.0, %v2049
    %v2051 = vpop.f32.mrb[0].mxu0
    %v2052 = vadd.f32 0.0, %v2051
    %v2053 = vpop.f32.mrb[0].mxu0
    %v2054 = vadd.f32 0.0, %v2053
    %2055 = vmatprep.mubr.bf16.mxu0 0
    %2056 = vmatmul.mubr.bf16.gmra.mrb[0].mxu0 %v696
    %v2057 = vpop.f32.mrb[0].mxu0
    %v2058 = vadd.f32 0.0, %v2057
    %v2059 = vpop.f32.mrb[0].mxu0
    %v2060 = vadd.f32 0.0, %v2059
    %v2061 = vpop.f32.mrb[0].mxu0
    %v2062 = vadd.f32 0.0, %v2061
    %v2063 = vpop.f32.mrb[0].mxu0
    %v2064 = vadd.f32 0.0, %v2063
    %2065 = vmatprep.mubr.bf16.mxu0 0
    %2066 = vmatmul.mubr.bf16.gmra.mrb[0].mxu0 %v697
    %v2067 = vpop.f32.mrb[0].mxu0
    %v2068 = vadd.f32 0.0, %v2067
    %v2069 = vpop.f32.mrb[0].mxu0
    %v2070 = vadd.f32 0.0, %v2069
    %v2071 = vpop.f32.mrb[0].mxu0
    %v2072 = vadd.f32 0.0, %v2071
    %v2073 = vpop.f32.mrb[0].mxu0
    %v2074 = vadd.f32 0.0, %v2073
    %2075 = vmatprep.mubr.bf16.mxu0 0
    %2076 = vmatmul.mubr.bf16.gmra.mrb[0].mxu0 %v698
    %v2077 = vpop.f32.mrb[0].mxu0
    %v2078 = vadd.f32 0.0, %v2077
    %v2079 = vpop.f32.mrb[0].mxu0
    %v2080 = vadd.f32 0.0, %v2079
    %v2081 = vpop.f32.mrb[0].mxu0
    %v2082 = vadd.f32 0.0, %v2081
    %v2083 = vpop.f32.mrb[0].mxu0
    %v2084 = vadd.f32 0.0, %v2083
    %2085 = vmatprep.mubr.bf16.mxu0 0
    %2086 = vmatmul.mubr.bf16.gmra.mrb[0].mxu0 %v699
    %v2087 = vpop.f32.mrb[0].mxu0
    %v2088 = vadd.f32 0.0, %v2087
    %v2089 = vpop.f32.mrb[0].mxu0
    %v2090 = vadd.f32 0.0, %v2089
    %v2091 = vpop.f32.mrb[0].mxu0
    %v2092 = vadd.f32 0.0, %v2091
    %v2093 = vpop.f32.mrb[0].mxu0
    %v2094 = vadd.f32 0.0, %v2093
    %2095 = vmatprep.mubr.bf16.mxu0 0
    %2096 = vmatmul.mubr.bf16.gmra.mrb[0].mxu0 %v700
    %v2097 = vpop.f32.mrb[0].mxu0
    %v2098 = vadd.f32 0.0, %v2097
    %v2099 = vpop.f32.mrb[0].mxu0
    %v2100 = vadd.f32 0.0, %v2099
    %v2101 = vpop.f32.mrb[0].mxu0
    %v2102 = vadd.f32 0.0, %v2101
    %v2103 = vpop.f32.mrb[0].mxu0
    %v2104 = vadd.f32 0.0, %v2103
    %2105 = vmatprep.mubr.bf16.mxu0 0
    %2106 = vmatmul.mubr.bf16.gmra.mrb[0].mxu0 %v701
    %v2107 = vpop.f32.mrb[0].mxu0
    %v2108 = vadd.f32 0.0, %v2107
    %v2109 = vpop.f32.mrb[0].mxu0
    %v2110 = vadd.f32 0.0, %v2109
    %v2111 = vpop.f32.mrb[0].mxu0
    %v2112 = vadd.f32 0.0, %v2111
    %v2113 = vpop.f32.mrb[0].mxu0
    %v2114 = vadd.f32 0.0, %v2113
    %2115 = vmatprep.mubr.bf16.mxu0 0
    %2116 = vmatmul.mubr.bf16.gmra.mrb[0].mxu0 %v702
    %v2117 = vpop.f32.mrb[0].mxu0
    %v2118 = vadd.f32 0.0, %v2117
    %v2119 = vpop.f32.mrb[0].mxu0
    %v2120 = vadd.f32 0.0, %v2119
    %v2121 = vpop.f32.mrb[0].mxu0
    %v2122 = vadd.f32 0.0, %v2121
    %v2123 = vpop.f32.mrb[0].mxu0
    %v2124 = vadd.f32 0.0, %v2123
    %2125 = vmatprep.mubr.bf16.mxu0 0
    %2126 = vmatmul.mubr.bf16.gmra.mrb[0].mxu0 %v703
    %v2127 = vpop.f32.mrb[0].mxu0
    %v2128 = vadd.f32 0.0, %v2127
    %v2129 = vpop.f32.mrb[0].mxu0
    %v2130 = vadd.f32 0.0, %v2129
    %v2131 = vpop.f32.mrb[0].mxu0
    %v2132 = vadd.f32 0.0, %v2131
    %v2133 = vpop.f32.mrb[0].mxu0
    %v2134 = vadd.f32 0.0, %v2133
    %2135 = vmatprep.mubr.bf16.mxu0 0
    %2136 = vmatmul.mubr.bf16.gmra.mrb[0].mxu0 %v704
    %v2137 = vpop.f32.mrb[0].mxu0
    %v2138 = vadd.f32 0.0, %v2137
    %v2139 = vpop.f32.mrb[0].mxu0
    %v2140 = vadd.f32 0.0, %v2139
    %v2141 = vpop.f32.mrb[0].mxu0
    %v2142 = vadd.f32 0.0, %v2141
    %v2143 = vpop.f32.mrb[0].mxu0
    %v2144 = vadd.f32 0.0, %v2143
    %2145 = vmatprep.mubr.bf16.mxu0 0
    %2146 = vmatmul.mubr.bf16.gmra.mrb[0].mxu0 %v705
    %v2147 = vpop.f32.mrb[0].mxu0
    %v2148 = vadd.f32 0.0, %v2147
    %v2149 = vpop.f32.mrb[0].mxu0
    %v2150 = vadd.f32 0.0, %v2149
    %v2151 = vpop.f32.mrb[0].mxu0
    %v2152 = vadd.f32 0.0, %v2151
    %v2153 = vpop.f32.mrb[0].mxu0
    %v2154 = vadd.f32 0.0, %v2153
    %2155 = vmatprep.mubr.bf16.mxu0 0
    %2156 = vmatmul.mubr.bf16.gmra.mrb[0].mxu0 %v706
    %v2157 = vpop.f32.mrb[0].mxu0
    %v2158 = vadd.f32 0.0, %v2157
    %v2159 = vpop.f32.mrb[0].mxu0
    %v2160 = vadd.f32 0.0, %v2159
    %v2161 = vpop.f32.mrb[0].mxu0
    %v2162 = vadd.f32 0.0, %v2161
    %v2163 = vpop.f32.mrb[0].mxu0
    %v2164 = vadd.f32 0.0, %v2163
    %2165 = vmatprep.mubr.bf16.mxu0 0
    %2166 = vmatmul.mubr.bf16.gmra.mrb[0].mxu0 %v707
    %v2167 = vpop.f32.mrb[0].mxu0
    %v2168 = vadd.f32 0.0, %v2167
    %v2169 = vpop.f32.mrb[0].mxu0
    %v2170 = vadd.f32 0.0, %v2169
    %v2171 = vpop.f32.mrb[0].mxu0
    %v2172 = vadd.f32 0.0, %v2171
    %v2173 = vpop.f32.mrb[0].mxu0
    %v2174 = vadd.f32 0.0, %v2173
    %2175 = vdwg.mxu0
    %v2176 = vmax.f32 %v2018, %v2022
    %v2177 = vmax.f32 %v2176, %v2028
    %v2178 = vmax.f32 %v2177, %v2032
    %v2179 = vmax.f32 %v2178, %v2038
    %v2180 = vmax.f32 %v2179, %v2042
    %v2181 = vmax.f32 %v2180, %v2048
    %v2182 = vmax.f32 %v2181, %v2052
    %v2183 = vmax.f32 %v2182, %v2058
    %v2184 = vmax.f32 %v2183, %v2062
    %v2185 = vmax.f32 %v2184, %v2068
    %v2186 = vmax.f32 %v2185, %v2072
    %v2187 = vmax.f32 %v2186, %v2078
    %v2188 = vmax.f32 %v2187, %v2082
    %v2189 = vmax.f32 %v2188, %v2088
    %v2190 = vmax.f32 %v2189, %v2092
    %v2191 = vrot.slane %v2190, 4
    %v2192 = vmax.f32 %v2190, %v2191
    %v2193 = vrot.slane %v2192, 2
    %v2194 = vmax.f32 %v2192, %v2193
    %v2195 = vrot.slane %v2194, 1
    %v2196 = vmax.f32 %v2194, %v2195
    %v2197 = vmax.f32 %v2020, %v2024
    %v2198 = vmax.f32 %v2197, %v2030
    %v2199 = vmax.f32 %v2198, %v2034
    %v2200 = vmax.f32 %v2199, %v2040
    %v2201 = vmax.f32 %v2200, %v2044
    %v2202 = vmax.f32 %v2201, %v2050
    %v2203 = vmax.f32 %v2202, %v2054
    %v2204 = vmax.f32 %v2203, %v2060
    %v2205 = vmax.f32 %v2204, %v2064
    %v2206 = vmax.f32 %v2205, %v2070
    %v2207 = vmax.f32 %v2206, %v2074
    %v2208 = vmax.f32 %v2207, %v2080
    %v2209 = vmax.f32 %v2208, %v2084
    %v2210 = vmax.f32 %v2209, %v2090
    %v2211 = vmax.f32 %v2210, %v2094
    %v2212 = vrot.slane %v2211, 4
    %v2213 = vmax.f32 %v2211, %v2212
    %v2214 = vrot.slane %v2213, 2
    %v2215 = vmax.f32 %v2213, %v2214
    %v2216 = vrot.slane %v2215, 1
    %v2217 = vmax.f32 %v2215, %v2216
    %v2218 = vmax.f32 %v2098, %v2102
    %v2219 = vmax.f32 %v2218, %v2108
    %v2220 = vmax.f32 %v2219, %v2112
    %v2221 = vmax.f32 %v2220, %v2118
    %v2222 = vmax.f32 %v2221, %v2122
    %v2223 = vmax.f32 %v2222, %v2128
    %v2224 = vmax.f32 %v2223, %v2132
    %v2225 = vmax.f32 %v2224, %v2138
    %v2226 = vmax.f32 %v2225, %v2142
    %v2227 = vmax.f32 %v2226, %v2148
    %v2228 = vmax.f32 %v2227, %v2152
    %v2229 = vmax.f32 %v2228, %v2158
    %v2230 = vmax.f32 %v2229, %v2162
    %v2231 = vmax.f32 %v2230, %v2168
    %v2232 = vmax.f32 %v2231, %v2172
    %v2233 = vrot.slane %v2232, 4
    %v2234 = vmax.f32 %v2232, %v2233
    %v2235 = vrot.slane %v2234, 2
    %v2236 = vmax.f32 %v2234, %v2235
    %v2237 = vrot.slane %v2236, 1
    %v2238 = vmax.f32 %v2236, %v2237
    %v2239 = vmax.f32 %v2100, %v2104
    %v2240 = vmax.f32 %v2239, %v2110
    %v2241 = vmax.f32 %v2240, %v2114
    %v2242 = vmax.f32 %v2241, %v2120
    %v2243 = vmax.f32 %v2242, %v2124
    %v2244 = vmax.f32 %v2243, %v2130
    %v2245 = vmax.f32 %v2244, %v2134
    %v2246 = vmax.f32 %v2245, %v2140
    %v2247 = vmax.f32 %v2246, %v2144
    %v2248 = vmax.f32 %v2247, %v2150
    %v2249 = vmax.f32 %v2248, %v2154
    %v2250 = vmax.f32 %v2249, %v2160
    %v2251 = vmax.f32 %v2250, %v2164
    %v2252 = vmax.f32 %v2251, %v2170
    %v2253 = vmax.f32 %v2252, %v2174
    %v2254 = vrot.slane %v2253, 4
    %v2255 = vmax.f32 %v2253, %v2254
    %v2256 = vrot.slane %v2255, 2
    %v2257 = vmax.f32 %v2255, %v2256
    %v2258 = vrot.slane %v2257, 1
    %v2259 = vmax.f32 %v2257, %v2258
    %v2260 = vld [vmem:[%s6 + $0x6] sm:$0x3]
    %v2262 = vlaneseq
    %v2263 = vshrl.u32 %v2262, 7
    %v2264 = vsub.s32 0, %v2263
    %v2265 = vrot.slane %v2260, %v2264
    %v2266 = vlaneseq
    %v2267 = vshrl.u32 %v2266, 7
    %v2268 = vsub.s32 1, %v2267
    %v2269 = vrot.slane %v2260, %v2268
    %v2272 = vadd.f32 %v2196, %v2265
    %v2273 = vadd.f32 %v2217, %v2269
    %v2274 = vadd.f32 %v2238, %v2265
    %v2275 = vadd.f32 %v2259, %v2269
    %v2276 = vmax.f32 %v2272, 0.0
    %v2277 = vmax.f32 %v2273, 0.0
    %v2278 = vmax.f32 %v2274, 0.0
    %v2279 = vmax.f32 %v2275, 0.0
    %v2284 = vrot.slane %v1099, 7
    %vm2285 = vcmask 1041409
    %v2286 = vsel %vm2285, %v2284, %v1097
    %v2287 = vrot.slane %v1100, 7
    %v2288 = vsel %vm2285, %v2287, %v1098
    %v2295 = vrot.slane %v1492, 7
    %v2296 = vsel %vm2285, %v2295, %v1490
    %v2297 = vrot.slane %v1493, 7
    %v2298 = vsel %vm2285, %v2297, %v1491
    %v2305 = vrot.slane %v1885, 7
    %v2306 = vsel %vm2285, %v2305, %v1883
    %v2307 = vrot.slane %v1886, 7
    %v2308 = vsel %vm2285, %v2307, %v1884
    %v2315 = vrot.slane %v2278, 7
    %v2316 = vsel %vm2285, %v2315, %v2276
    %v2317 = vrot.slane %v2279, 7
    %v2318 = vsel %vm2285, %v2317, %v2277
    %v2321 = vpack.c.bf16 %v2286, %v2286
    %v2322 = vpack.c.bf16 %v2288, %v2288
    %v2323 = vpack.c.bf16 %v2296, %v2296
    %v2324 = vpack.c.bf16 %v2298, %v2298
    %v2325 = vpack.c.bf16 %v2306, %v2306
    %v2326 = vpack.c.bf16 %v2308, %v2308
    %v2327 = vpack.c.bf16 %v2316, %v2316
    %v2328 = vpack.c.bf16 %v2318, %v2318
    %v2337 = vcombine.low %v2321, %v2322
    %v2338 = vcombine.low %v2323, %v2324
    %v2339 = vcombine.low %v2325, %v2326
    %v2340 = vcombine.low %v2327, %v2328
    %v2342 = vunpack.c.l.s4 1966171168
    %v2343 = vunpack.c.0.s8 %v2342
    %v2344 = vlaneseq
    %v2345 = vshrl.u32 %v2344, 7
    %v2346 = vsub.s32 %v2343, %v2345
    %v2347 = vrot.slane %v2337, %v2346
    %v2349 = vunpack.c.l.s4 1966171168
    %v2350 = vunpack.c.0.s8 %v2349
    %v2351 = vlaneseq
    %v2352 = vshrl.u32 %v2351, 7
    %v2353 = vsub.s32 %v2350, %v2352
    %v2354 = vrot.slane %v2338, %v2353
    %v2356 = vunpack.c.l.s4 1966171168
    %v2357 = vunpack.c.0.s8 %v2356
    %v2358 = vlaneseq
    %v2359 = vshrl.u32 %v2358, 7
    %v2360 = vsub.s32 %v2357, %v2359
    %v2361 = vrot.slane %v2339, %v2360
    %v2363 = vunpack.c.l.s4 1966171168
    %v2364 = vunpack.c.0.s8 %v2363
    %v2365 = vlaneseq
    %v2366 = vshrl.u32 %v2365, 7
    %v2367 = vsub.s32 %v2364, %v2366
    %v2368 = vrot.slane %v2340, %v2367
    %v2369 = vcombine.low %v2347, %v2354
    %v2370 = vcombine.low %v2361, %v2368
    %v2372 = vunpack.c.l.s4 1966171168
    %v2373 = vunpack.c.0.s8 %v2372
    %v2374 = vlaneseq
    %v2375 = vshrl.u32 %v2374, 7
    %v2376 = vsub.s32 %v2373, %v2375
    %v2377 = vrot.slane %v2369, %v2376
    %v2379 = vunpack.c.l.s4 1966171168
    %v2380 = vunpack.c.0.s8 %v2379
    %v2381 = vlaneseq
    %v2382 = vshrl.u32 %v2381, 7
    %v2383 = vsub.s32 %v2380, %v2382
    %v2384 = vrot.slane %v2370, %v2383
    %v2385 = vcombine.low %v2377, %v2384
    %2387 = vst [vmem:[#allocation7] sm:$0xff] %v2385
    // Predicated region
    $region38: #{tpu_custom_call.1} parent=1 // pred_check
      _
    $region39: #{tpu_custom_call.1} parent=1 // pred_check_branch
      %2389 = sbr.rel (0) target = $region41
    $region40: #{tpu_custom_call.1} parent=1 // pred_region
      %s2391 = ssub.s32 128, 128
      %2392 = vsyncadd [#allocation4], %s2391
      %s2394 = sshll.u32 [#allocation7], 4
      %s2395 = int_to_ptr.vmem [resolvable:$true] %s2394
      %2397 = dma.vmem_to_hbm [thread:$0]  %s2395, 128, %s7, [#allocation4]
    $region41: #{tpu_custom_call.1} parent=1 // pred_fallthru
      _
    // Predicated region
    $region42: #{tpu_custom_call.1} parent=1 // pred_check
      _
    $region43: #{tpu_custom_call.1} parent=1 // pred_check_branch
      %2399 = sbr.rel (0) target = $region45
    $region44: #{tpu_custom_call.1} parent=1 // pred_region
      %2400 = dma.done [#allocation4], 128
    $region45: #{tpu_custom_call.1} parent=1 // pred_fallthru
      _
    %2401 = vsyncpa [#allocation3], 1
    %2402 = vsyncpa [#allocation6], 1
    %2403 = vsyncpa [#allocation4], 1

</llo_original>
